<compile_context>
chip_gen: v7x
topology: tpu7x:2x2x1
jax: 0.10.0
libtpu: 0.0.40
codegen_flags: <defaults>
</compile_context>

<pallas_src>
import functools

import jax
import jax.numpy as jnp
import numpy as np
from jax.experimental import pallas as pl
from jax.experimental.pallas import tpu as pltpu


# ----------------------------- generation-aware sizing -----------------------

def _tpu_vmem_capacity_bytes():
    try:
        return int(pltpu.get_tpu_info().vmem_capacity_bytes)
    except Exception:
        return 64 * 1024 * 1024  # conservative (v7x-sized) fallback


_VMEM_CAP = _tpu_vmem_capacity_bytes()
# ~48 MiB scoped limit on v7x (64 MiB physical), ~96 MiB on v5e/v6e (128 MiB).
_VMEM_LIMIT_BYTES = min((_VMEM_CAP * 3) // 4, 112 * 1024 * 1024)
# Bigger row tiles on the 128-MiB parts amortize per-grid-step overhead.
_TARGET_ROWS = 512 if _VMEM_CAP <= 80 * 1024 * 1024 else 1024

_HIGHEST = jax.lax.Precision.HIGHEST


def _cparams(dims):
    return pltpu.CompilerParams(
        dimension_semantics=dims, vmem_limit_bytes=_VMEM_LIMIT_BYTES
    )


def _pick_row_tile(H, W, target_rows):
    """Largest th dividing H with th*W <= target_rows and th*W a multiple of 8."""
    best = None
    for th in range(1, H + 1):
        if H % th == 0 and th * W <= target_rows and (th * W) % 8 == 0:
            best = th
    return best if best is not None else H


# ----------------------------- GroupNorm-1 stats kernel ----------------------

def gn_stats_kernel(x_ref, g_ref, b_ref, ohcg_ref, ohgc_ref, o_ref,
                    s_ref, q_ref, *, inv_count, eps):
    """Per-group sum / sum-of-squares over HW tiles; finalize per-channel
    scale/shift on the last tile.  f32 VPU row reductions + tiny one-hot dots."""
    m = pl.program_id(1)

    @pl.when(m == 0)
    def _():
        s_ref[...] = jnp.zeros_like(s_ref)
        q_ref[...] = jnp.zeros_like(q_ref)

    x = x_ref[0].astype(jnp.float32)                            # (TM, C)
    xs = jnp.sum(x, axis=0, keepdims=True)                      # (1, C)
    xq = jnp.sum(x * x, axis=0, keepdims=True)                  # (1, C)
    s_ref[...] += jnp.dot(xs, ohcg_ref[...], precision=_HIGHEST,
                          preferred_element_type=jnp.float32)
    q_ref[...] += jnp.dot(xq, ohcg_ref[...], precision=_HIGHEST,
                          preferred_element_type=jnp.float32)

    @pl.when(m == pl.num_programs(1) - 1)
    def _():
        mean_g = s_ref[...] * inv_count                         # (1, G)
        var_g = q_ref[...] * inv_count - mean_g * mean_g
        inv_g = jax.lax.rsqrt(var_g + eps)
        mean_c = jnp.dot(mean_g, ohgc_ref[...], precision=_HIGHEST,
                         preferred_element_type=jnp.float32)    # (1, C)
        inv_c = jnp.dot(inv_g, ohgc_ref[...], precision=_HIGHEST,
                        preferred_element_type=jnp.float32)
        scale = g_ref[...] * inv_c
        shift = b_ref[...] - mean_c * scale
        o_ref[0, 0:1, :] = scale
        o_ref[0, 1:2, :] = shift


def gn_scale_shift(x_flat, gamma, beta, groups, tm, eps=1e-5):
    """x_flat: (B, HW, C) -> (B, 2, C) per-channel [scale; shift] for GroupNorm."""
    B, HW, C = x_flat.shape
    assert C % groups == 0 and HW % tm == 0
    G = groups
    cg = C // G
    oh_cg = jnp.repeat(jnp.eye(G, dtype=jnp.float32), cg, axis=0)   # (C, G)
    oh_gc = oh_cg.T
    kern = functools.partial(gn_stats_kernel,
                             inv_count=1.0 / float(HW * cg), eps=eps)
    return pl.pallas_call(
        kern,
        out_shape=jax.ShapeDtypeStruct((B, 2, C), jnp.float32),
        grid=(B, HW // tm),
        in_specs=[
            pl.BlockSpec((1, tm, C), lambda b, m: (b, m, 0)),
            pl.BlockSpec((1, C), lambda b, m: (0, 0)),
            pl.BlockSpec((1, C), lambda b, m: (0, 0)),
            pl.BlockSpec((C, G), lambda b, m: (0, 0)),
            pl.BlockSpec((G, C), lambda b, m: (0, 0)),
        ],
        out_specs=pl.BlockSpec((1, 2, C), lambda b, m: (b, 0, 0)),
        scratch_shapes=[pltpu.VMEM((1, G), jnp.float32),
                        pltpu.VMEM((1, G), jnp.float32)],
        compiler_params=_cparams(("parallel", "arbitrary")),
    )(x_flat, gamma.reshape(1, C), beta.reshape(1, C), oh_cg, oh_gc)


# ----------------------------- shared conv helpers ----------------------------

def _gn_silu_window(i, n_t, top_ref, mid_ref, bot_ref, ss_ref):
    """GN affine + SiLU on a halo row window assembled from three specs.

    The top/bottom halo rows at the image boundary are the conv's zero-pad rows,
    so only those (1, W, C) rows are zeroed -- interior tiles pay no full-tile
    masking (perf-review item: narrow the post-GN masking)."""
    scale = ss_ref[:, 0:1, :]                                   # (1, 1, C)
    shift = ss_ref[:, 1:2, :]

    def act(v):
        a = v.astype(jnp.float32) * scale + shift
        return a * jax.nn.sigmoid(a)

    top = jnp.where(i == 0, 0.0, act(top_ref[0]))               # (1, W, C)
    bot = jnp.where(i == n_t - 1, 0.0, act(bot_ref[0]))
    mid = act(mid_ref[0])                                       # (th, W, C)
    return jnp.concatenate([top, mid, bot], axis=0)             # (th+2, W, C) f32


def _conv3x3_acc(a, w_ref, th, W, cdt):
    """3x3 stride-1 conv of a (th+2, W, C) activated window as 9 MXU matmuls.

    The two column-shifted copies (conv's left/right zero-pad columns) are built
    once; each copy is flattened once and cast to bf16 once.  The 9 taps are then
    pure row-offset slices -- no per-tap slice+reshape relayout or cast.
    # TODO(synk): the two column shifts could use pltpu.roll (XLU) instead of
    # concatenate to also remove the remaining two in-VMEM copies."""
    rows, _, C = a.shape
    Cout = w_ref.shape[-1]
    zcol = jnp.zeros((rows, 1, C), jnp.float32)
    b0 = jnp.concatenate([zcol, a[:, :W - 1, :]], axis=1)       # input col c-1
    b2 = jnp.concatenate([a[:, 1:, :], zcol], axis=1)           # input col c+1
    flats = [b.reshape(rows * W, C).astype(cdt) for b in (b0, a, b2)]
    acc = jnp.zeros((th * W, Cout), jnp.float32)
    for dy in range(3):
        for dx in range(3):
            acc += jnp.dot(flats[dx][dy * W:dy * W + th * W, :], w_ref[dy, dx],
                           preferred_element_type=jnp.float32)
    return acc


# --------------- stage 1: GN1-affine + SiLU + conv3x3 (+emb) + GN2 stats ------

def conv1_kernel(xt_ref, xm_ref, xb_ref, ss1_ref, w_ref, b_ref, g2_ref, be2_ref,
                 ohcg_ref, ohgc_ref, y_ref, ss2_ref, s_ref, q_ref, *,
                 th, W, inv_count2, eps, cdt):
    i = pl.program_id(1)
    n_t = pl.num_programs(1)

    @pl.when(i == 0)
    def _():
        s_ref[...] = jnp.zeros_like(s_ref)
        q_ref[...] = jnp.zeros_like(q_ref)

    a = _gn_silu_window(i, n_t, xt_ref, xm_ref, xb_ref, ss1_ref)
    y = _conv3x3_acc(a, w_ref, th, W, cdt) + b_ref[0]           # (th*W, Cout) f32
    y_ref[0] = y.astype(y_ref.dtype)

    # Fused GroupNorm-2 statistics while the y tile is still in VMEM
    # (eliminates the full HBM re-read of y that a second stats pass would do).
    ys = jnp.sum(y, axis=0, keepdims=True)
    yq = jnp.sum(y * y, axis=0, keepdims=True)
    s_ref[...] += jnp.dot(ys, ohcg_ref[...], precision=_HIGHEST,
                          preferred_element_type=jnp.float32)
    q_ref[...] += jnp.dot(yq, ohcg_ref[...], precision=_HIGHEST,
                          preferred_element_type=jnp.float32)

    @pl.when(i == n_t - 1)
    def _():
        mean_g = s_ref[...] * inv_count2
        var_g = q_ref[...] * inv_count2 - mean_g * mean_g
        inv_g = jax.lax.rsqrt(var_g + eps)
        mean_c = jnp.dot(mean_g, ohgc_ref[...], precision=_HIGHEST,
                         preferred_element_type=jnp.float32)
        inv_c = jnp.dot(inv_g, ohgc_ref[...], precision=_HIGHEST,
                        preferred_element_type=jnp.float32)
        sc = g2_ref[...] * inv_c
        ss2_ref[0, 0:1, :] = sc
        ss2_ref[0, 1:2, :] = be2_ref[...] - mean_c * sc


def conv_stage1(x_nhwc, ss1, w_oihw, bias1, gamma2, beta2, groups, th, *,
                eps=1e-5, compute_dtype=jnp.bfloat16, y_dtype=jnp.bfloat16):
    """Returns (y, ss2): y = conv1(silu(gn1(x))) + bias1 as (B, H*W, Cout) bf16,
    ss2 = GroupNorm-2 per-channel [scale; shift] (B, 2, Cout) f32."""
    B, H, W, Cin = x_nhwc.shape
    Cout = w_oihw.shape[0]
    assert H % th == 0
    n_t = H // th
    G = groups
    cg = Cout // G
    w4 = jnp.transpose(w_oihw, (2, 3, 1, 0)).astype(compute_dtype)  # (3,3,Cin,Cout)
    oh_cg = jnp.repeat(jnp.eye(G, dtype=jnp.float32), cg, axis=0)   # (Cout, G)
    oh_gc = oh_cg.T
    kern = functools.partial(conv1_kernel, th=th, W=W,
                             inv_count2=1.0 / float(H * W * cg), eps=eps,
                             cdt=compute_dtype)
    top_map = lambda b, i: (b, jnp.maximum(i * th - 1, 0), 0, 0)
    bot_map = lambda b, i: (b, jnp.minimum(i * th + th, H - 1), 0, 0)
    # TODO(synk): for Cout >= 512 add a "parallel" Cout grid axis (N-tile 256)
    # to keep the accumulator small and feed both v7x TensorCores.
    y, ss2 = pl.pallas_call(
        kern,
        out_shape=(jax.ShapeDtypeStruct((B, H * W, Cout), y_dtype),
                   jax.ShapeDtypeStruct((B, 2, Cout), jnp.float32)),
        grid=(B, n_t),
        in_specs=[
            pl.BlockSpec((1, 1, W, Cin), top_map),                       # top halo row
            pl.BlockSpec((1, th, W, Cin), lambda b, i: (b, i, 0, 0)),    # body rows
            pl.BlockSpec((1, 1, W, Cin), bot_map),                       # bottom halo row
            pl.BlockSpec((1, 2, Cin), lambda b, i: (b, 0, 0)),
            pl.BlockSpec((3, 3, Cin, Cout), lambda b, i: (0, 0, 0, 0)),
            pl.BlockSpec((1, 1, Cout), lambda b, i: (b, 0, 0)),
            pl.BlockSpec((1, Cout), lambda b, i: (0, 0)),
            pl.BlockSpec((1, Cout), lambda b, i: (0, 0)),
            pl.BlockSpec((Cout, G), lambda b, i: (0, 0)),
            pl.BlockSpec((G, Cout), lambda b, i: (0, 0)),
        ],
        out_specs=(pl.BlockSpec((1, th * W, Cout), lambda b, i: (b, i, 0)),
                   pl.BlockSpec((1, 2, Cout), lambda b, i: (b, 0, 0))),
        scratch_shapes=[pltpu.VMEM((1, G), jnp.float32),
                        pltpu.VMEM((1, G), jnp.float32)],
        compiler_params=_cparams(("parallel", "arbitrary")),
    )(x_nhwc, x_nhwc, x_nhwc, ss1, w4, bias1,
      gamma2.reshape(1, Cout), beta2.reshape(1, Cout), oh_cg, oh_gc)
    return y, ss2


# --------------- stage 2: GN2-affine + SiLU + conv3x3 + fused 1x1 skip --------

def conv2_kernel(yt_ref, ym_ref, yb_ref, ss2_ref, xs_ref, w_ref, ws_ref, b_ref,
                 z_ref, *, th, W, cdt):
    i = pl.program_id(1)
    n_t = pl.num_programs(1)
    a = _gn_silu_window(i, n_t, yt_ref, ym_ref, yb_ref, ss2_ref)
    acc = _conv3x3_acc(a, w_ref, th, W, cdt)
    # fused 1x1-conv skip branch on the raw input (second dot into the same acc)
    acc += jnp.dot(xs_ref[0].astype(cdt), ws_ref[...],
                   preferred_element_type=jnp.float32)
    z_ref[0] = (acc + b_ref[0]).astype(z_ref.dtype)


def conv_stage2(y_nhwc, ss2, x_flat, w_oihw, skip_w, bias2, th, *,
                compute_dtype=jnp.bfloat16, z_dtype=jnp.bfloat16):
    B, H, W, C = y_nhwc.shape
    Cout = w_oihw.shape[0]
    Cs = x_flat.shape[-1]
    assert H % th == 0
    n_t = H // th
    w4 = jnp.transpose(w_oihw, (2, 3, 1, 0)).astype(compute_dtype)
    kern = functools.partial(conv2_kernel, th=th, W=W, cdt=compute_dtype)
    top_map = lambda b, i: (b, jnp.maximum(i * th - 1, 0), 0, 0)
    bot_map = lambda b, i: (b, jnp.minimum(i * th + th, H - 1), 0, 0)
    # TODO(synk): add pipeline_mode=pl.Buffered(3) on the body spec if traces show
    # exposed DMA when the grid is short.
    return pl.pallas_call(
        kern,
        out_shape=jax.ShapeDtypeStruct((B, H * W, Cout), z_dtype),
        grid=(B, n_t),
        in_specs=[
            pl.BlockSpec((1, 1, W, C), top_map),
            pl.BlockSpec((1, th, W, C), lambda b, i: (b, i, 0, 0)),
            pl.BlockSpec((1, 1, W, C), bot_map),
            pl.BlockSpec((1, 2, C), lambda b, i: (b, 0, 0)),
            pl.BlockSpec((1, th * W, Cs), lambda b, i: (b, i, 0)),
            pl.BlockSpec((3, 3, C, Cout), lambda b, i: (0, 0, 0, 0)),
            pl.BlockSpec((Cs, Cout), lambda b, i: (0, 0)),
            pl.BlockSpec((1, 1, Cout), lambda b, i: (0, 0, 0)),
        ],
        out_specs=pl.BlockSpec((1, th * W, Cout), lambda b, i: (b, i, 0)),
        compiler_params=_cparams(("parallel", "parallel")),
    )(y_nhwc, y_nhwc, y_nhwc, ss2, x_flat, w4, skip_w.astype(compute_dtype), bias2)


# ----------------------------- stage 3: stride-2 down conv --------------------

def downconv_kernel(zte_ref, zto_ref, zme_ref, zmo_ref, w_ref, b_ref, o_ref, *,
                    tho, Wo, cdt):
    """3x3 stride-2 conv over a row tile.  Inputs are bf16 column-parity slabs
    (even/odd columns); row parity and the dx=0 shift are done in-kernel.
    Buffers are flattened and cast to bf16 once; taps are row-offset slices."""
    ro = pl.program_id(1)
    C = zme_ref.shape[-1]
    Cout = w_ref.shape[-1]
    f32 = jnp.float32

    # halo row = z row 2*ro*tho - 1; for ro == 0 it is the conv's zero-pad row.
    zt_e = jnp.where(ro == 0, 0.0, zte_ref[0].astype(f32))       # (1, Wo, C)
    zt_o = jnp.where(ro == 0, 0.0, zto_ref[0].astype(f32))
    # row parity of the 2*tho body rows: [:, 0] -> dy=1 taps, [:, 1] (+halo) -> dy=0/2.
    zm_e = zme_ref[0].astype(f32).reshape(tho, 2, Wo, C)
    zm_o = zmo_ref[0].astype(f32).reshape(tho, 2, Wo, C)
    we_e = jnp.concatenate([zt_e, zm_e[:, 1]], axis=0)           # (tho+1, Wo, C)
    we_o = jnp.concatenate([zt_o, zm_o[:, 1]], axis=0)
    wo_e = zm_e[:, 0]                                            # (tho,   Wo, C)
    wo_o = zm_o[:, 0]
    # dx = 0 taps read input column 2c-1: odd columns shifted right, zero-pad col 0.
    sh_we = jnp.concatenate(
        [jnp.zeros((tho + 1, 1, C), f32), we_o[:, :Wo - 1, :]], axis=1)
    sh_wo = jnp.concatenate(
        [jnp.zeros((tho, 1, C), f32), wo_o[:, :Wo - 1, :]], axis=1)

    e_bufs = [t.reshape((tho + 1) * Wo, C).astype(cdt) for t in (sh_we, we_e, we_o)]
    o_bufs = [t.reshape(tho * Wo, C).astype(cdt) for t in (sh_wo, wo_e, wo_o)]

    acc = jnp.zeros((tho * Wo, Cout), jnp.float32)
    for dx in range(3):
        acc += jnp.dot(e_bufs[dx][:tho * Wo, :], w_ref[0, dx],
                       preferred_element_type=jnp.float32)        # dy = 0
        acc += jnp.dot(o_bufs[dx], w_ref[1, dx],
                       preferred_element_type=jnp.float32)        # dy = 1
        acc += jnp.dot(e_bufs[dx][Wo:, :], w_ref[2, dx],
                       preferred_element_type=jnp.float32)        # dy = 2
    o_ref[0] = (acc + b_ref[0]).astype(o_ref.dtype)


def conv3x3_stride2(z_even_cols, z_odd_cols, w_oihw, bias, tho, *,
                    out_dtype=jnp.float32, compute_dtype=jnp.bfloat16):
    B, H, Wo, C = z_even_cols.shape
    Ho = H // 2
    Cout = w_oihw.shape[0]
    assert Ho % tho == 0
    w4 = jnp.transpose(w_oihw, (2, 3, 1, 0)).astype(compute_dtype)
    kern = functools.partial(downconv_kernel, tho=tho, Wo=Wo, cdt=compute_dtype)
    top_map = lambda b, r: (b, jnp.maximum(2 * r * tho - 1, 0), 0, 0)
    return pl.pallas_call(
        kern,
        out_shape=jax.ShapeDtypeStruct((B, Ho * Wo, Cout), out_dtype),
        grid=(B, Ho // tho),
        in_specs=[
            pl.BlockSpec((1, 1, Wo, C), top_map),                         # halo, even cols
            pl.BlockSpec((1, 1, Wo, C), top_map),                         # halo, odd cols
            pl.BlockSpec((1, 2 * tho, Wo, C), lambda b, r: (b, r, 0, 0)),  # body, even cols
            pl.BlockSpec((1, 2 * tho, Wo, C), lambda b, r: (b, r, 0, 0)),  # body, odd cols
            pl.BlockSpec((3, 3, C, Cout), lambda b, r: (0, 0, 0, 0)),
            pl.BlockSpec((1, 1, Cout), lambda b, r: (0, 0, 0)),
        ],
        out_specs=pl.BlockSpec((1, tho * Wo, Cout), lambda b, r: (b, r, 0)),
        compiler_params=_cparams(("parallel", "parallel")),
    )(z_even_cols, z_odd_cols, z_even_cols, z_odd_cols, w4, bias)


# ----------------------------- full module forward ---------------------------

def residual_block_down_pallas(x_nchw, v, p, groups, row_tile=None,
                               down_row_tile=None):
    B, Cin, H, W = x_nchw.shape
    Cout = p["w1"].shape[0]
    assert H % 2 == 0 and W % 2 == 0
    Ho, Wo = H // 2, W // 2

    th = row_tile if row_tile is not None else _pick_row_tile(H, W, _TARGET_ROWS)
    tho = (down_row_tile if down_row_tile is not None
           else _pick_row_tile(Ho, Wo, _TARGET_ROWS))
    assert H % th == 0 and Ho % tho == 0

    # TODO(synk): keep the surrounding model NHWC end-to-end and drop these
    # boundary transposes; they exist only to preserve the PyTorch NCHW API.
    x = jnp.transpose(x_nchw, (0, 2, 3, 1))                     # (B, H, W, Cin)
    x_flat = x.reshape(B, H * W, Cin)

    # Time embedding (SiLU + Linear): tiny matmul folded into the conv1 bias.
    emb = jax.nn.silu(v) @ p["we"].T + p["bemb"]                # (B, Cout)
    bias1 = (p["b1"][None, :] + emb)[:, None, :]                # (B, 1, Cout)

    # Stage 1: GN1 statistics (one read of x).
    ss1 = gn_scale_shift(x_flat, p["g1"], p["be1"], groups, th * W)

    # Stage 2: fused GN1-affine + SiLU + conv1 (+emb bias), GN2 stats in epilogue.
    y, ss2 = conv_stage1(x, ss1, p["w1"], bias1, p["g2"], p["be2"], groups, th)

    # Stage 3: fused GN2-affine + SiLU + conv2 with the 1x1 skip fused in (bf16 z).
    ws_mm = p["ws"].reshape(Cout, Cin).T                        # (Cin, Cout)
    bias2 = (p["b2"] + p["bs"]).reshape(1, 1, Cout)
    z = conv_stage2(y.reshape(B, H, W, Cout), ss2, x_flat, p["w2"], ws_mm,
                    bias2, th)                                  # (B, H*W, Cout) bf16

    # Stage 4: stride-2 down conv.  Only a cheap bf16 column-parity split is done
    # in the wrapper; row parity / halo handled in-kernel with row tiling.
    z4 = z.reshape(B, H, W, Cout)
    z_even = z4[:, :, 0::2, :]
    z_odd = z4[:, :, 1::2, :]
    out = conv3x3_stride2(z_even, z_odd, p["wd"], p["bd"].reshape(1, 1, Cout), tho)
    return jnp.transpose(out.reshape(B, Ho, Wo, Cout), (0, 3, 1, 2))


# ----------------------------- pure-JAX reference ----------------------------

def _silu(x):
    return x * jax.nn.sigmoid(x)


def _groupnorm_ref(x, gamma, beta, groups, eps=1e-5):
    B, C, H, W = x.shape
    xr = x.reshape(B, groups, C // groups, H, W)
    mean = xr.mean(axis=(2, 3, 4), keepdims=True)
    var = ((xr - mean) ** 2).mean(axis=(2, 3, 4), keepdims=True)
    xn = ((xr - mean) * jax.lax.rsqrt(var + eps)).reshape(B, C, H, W)
    return xn * gamma.reshape(1, C, 1, 1) + beta.reshape(1, C, 1, 1)


def _conv_ref(x, w, b, stride=1, padding=1):
    out = jax.lax.conv_general_dilated(
        x, w, (stride, stride), [(padding, padding), (padding, padding)],
        dimension_numbers=("NCHW", "OIHW", "NCHW"),
    )
    return out + b.reshape(1, -1, 1, 1)


def residual_block_down_ref(x, v, p, groups):
    y = _conv_ref(_silu(_groupnorm_ref(x, p["g1"], p["be1"], groups)),
                  p["w1"], p["b1"])
    emb = _silu(v) @ p["we"].T + p["bemb"]
    y = y + emb[:, :, None, None]
    y = _conv_ref(_silu(_groupnorm_ref(y, p["g2"], p["be2"], groups)),
                  p["w2"], p["b2"])
    out = y + _conv_ref(x, p["ws"], p["bs"], padding=0)
    return _conv_ref(out, p["wd"], p["bd"], stride=2, padding=1)


# ----------------------------- main ------------------------------------------

if __name__ == "__main__":
    B, Cin, Cout, H, W, E, G = 2, 4, 8, 16, 16, 32, 2

    key = jax.random.PRNGKey(0)
    ks = jax.random.split(key, 16)

    def nrm(k, shape, scale=0.1):
        return scale * jax.random.normal(k, shape, dtype=jnp.float32)

    params = {
        "g1": 1.0 + nrm(ks[0], (Cin,)),
        "be1": nrm(ks[1], (Cin,)),
        "w1": nrm(ks[2], (Cout, Cin, 3, 3)),
        "b1": nrm(ks[3], (Cout,)),
        "g2": 1.0 + nrm(ks[4], (Cout,)),
        "be2": nrm(ks[5], (Cout,)),
        "w2": nrm(ks[6], (Cout, Cout, 3, 3)),
        "b2": nrm(ks[7], (Cout,)),
        "we": nrm(ks[8], (Cout, E)),
        "bemb": nrm(ks[9], (Cout,)),
        "ws": nrm(ks[10], (Cout, Cin, 1, 1)),
        "bs": nrm(ks[11], (Cout,)),
        "wd": nrm(ks[12], (Cout, Cout, 3, 3)),
        "bd": nrm(ks[13], (Cout,)),
    }

    x = jax.random.normal(ks[14], (B, Cin, H, W), dtype=jnp.float32)
    v = jax.random.normal(ks[15], (B, E), dtype=jnp.float32)

    # row_tile=8 / down_row_tile=4 -> 2 row tiles per image in every stage,
    # exercising the halo specs and the cross-tile GN2-stats accumulation.
    out = residual_block_down_pallas(x, v, params, G, row_tile=8, down_row_tile=4)
    out = jax.block_until_ready(out)

    ref = jax.block_until_ready(residual_block_down_ref(x, v, params, G))
    assert out.shape == (B, Cout, H // 2, W // 2), out.shape
    # bf16 MXU operands / bf16 inter-stage tensors with f32 accumulation.
    np.testing.assert_allclose(np.asarray(out), np.asarray(ref),
                               rtol=2e-2, atol=2e-2)

    print("KERNEL_OK")
</pallas_src>

<mosaic_0001>
module attributes {stable_mosaic.version = 11 : i64} {
  func.func @gn_stats_kernel(%arg0: i32, %arg1: i32, %arg2: memref<1x128x4xf32, #tpu.memory_space<vmem>>, %arg3: memref<1x4xf32, #tpu.memory_space<vmem>>, %arg4: memref<1x4xf32, #tpu.memory_space<vmem>>, %arg5: memref<4x2xf32, #tpu.memory_space<vmem>>, %arg6: memref<2x4xf32, #tpu.memory_space<vmem>>, %arg7: memref<1x2x4xf32, #tpu.memory_space<vmem>>, %arg8: memref<1x2xf32, #tpu.memory_space<vmem>>, %arg9: memref<1x2xf32, #tpu.memory_space<vmem>>) attributes {dimension_semantics = [#tpu.dimension_semantics<parallel>, #tpu.dimension_semantics<arbitrary>], iteration_bounds = array<i64: 2, 2>, scalar_prefetch = 0 : i64, scratch_operands = 2 : i64, tpu.core_type = #tpu.core_type<tc>, window_params = [{transform_indices = @transform_0, window_bounds = array<i64: 1, 128, 4>}, {pipeline_mode = #tpu.pipeline_mode<synchronous>, transform_indices = @transform_1, window_bounds = array<i64: 1, 4>}, {pipeline_mode = #tpu.pipeline_mode<synchronous>, transform_indices = @transform_2, window_bounds = array<i64: 1, 4>}, {pipeline_mode = #tpu.pipeline_mode<synchronous>, transform_indices = @transform_3, window_bounds = array<i64: 4, 2>}, {pipeline_mode = #tpu.pipeline_mode<synchronous>, transform_indices = @transform_4, window_bounds = array<i64: 2, 4>}, {transform_indices = @transform_5, window_bounds = array<i64: 1, 2, 4>}]} {
    %c0_i32 = arith.constant 0 : i32
    %0 = arith.cmpi eq, %arg1, %c0_i32 : i32
    %1 = arith.extui %0 : i1 to i32
    %c0_i32_0 = arith.constant 0 : i32
    %2 = arith.cmpi ne, %1, %c0_i32_0 : i32
    scf.if %2 {
      %cst_19 = arith.constant 0.000000e+00 : f32
      %23 = vector.broadcast %cst_19 : f32 to vector<1x2xf32>
      %c0_20 = arith.constant 0 : index
      %c0_21 = arith.constant 0 : index
      %24 = vector.load %arg8[%c0_20, %c0_21] : memref<1x2xf32, #tpu.memory_space<vmem>>, vector<1x2xf32>
      tpu.vector_store %arg8[%c0_20, %c0_21], %23 {strides = array<i32>} : memref<1x2xf32, #tpu.memory_space<vmem>>, vector<1x2xf32>,
      %cst_22 = arith.constant 0.000000e+00 : f32
      %25 = vector.broadcast %cst_22 : f32 to vector<1x2xf32>
      %c0_23 = arith.constant 0 : index
      %c0_24 = arith.constant 0 : index
      %26 = vector.load %arg9[%c0_23, %c0_24] : memref<1x2xf32, #tpu.memory_space<vmem>>, vector<1x2xf32>
      tpu.vector_store %arg9[%c0_23, %c0_24], %25 {strides = array<i32>} : memref<1x2xf32, #tpu.memory_space<vmem>>, vector<1x2xf32>,
    } else {
    }
    %c0 = arith.constant 0 : index
    %c0_1 = arith.constant 0 : index
    %c0_2 = arith.constant 0 : index
    %3 = vector.load %arg2[%c0, %c0_1, %c0_2] : memref<1x128x4xf32, #tpu.memory_space<vmem>>, vector<1x128x4xf32>
    %4 = vector.shape_cast %3 : vector<1x128x4xf32> to vector<128x4xf32>
    %cst = arith.constant dense<0.000000e+00> : vector<4xf32>
    %5 = vector.multi_reduction <add>, %4, %cst [0] : vector<128x4xf32> to vector<4xf32>
    %6 = vector.shape_cast %5 : vector<4xf32> to vector<1x4xf32>
    %7 = arith.mulf %4, %4 : vector<128x4xf32>
    %cst_3 = arith.constant dense<0.000000e+00> : vector<4xf32>
    %8 = vector.multi_reduction <add>, %7, %cst_3 [0] : vector<128x4xf32> to vector<4xf32>
    %9 = vector.shape_cast %8 : vector<4xf32> to vector<1x4xf32>
    %c0_4 = arith.constant 0 : index
    %c0_5 = arith.constant 0 : index
    %10 = vector.load %arg8[%c0_4, %c0_5] : memref<1x2xf32, #tpu.memory_space<vmem>>, vector<1x2xf32>
    %c0_6 = arith.constant 0 : index
    %c0_7 = arith.constant 0 : index
    %11 = vector.load %arg5[%c0_6, %c0_7] : memref<4x2xf32, #tpu.memory_space<vmem>>, vector<4x2xf32>
    %cst_8 = arith.constant dense<0.000000e+00> : vector<1x2xf32>
    %12 = tpu.matmul %6, %11, %cst_8 {dimension_numbers = #tpu.dot_dimension_numbers<[1], [0], [0], [1], [0, 0, 1, 1], [], []>, precision = #tpu.contract_precision<fp32>} : vector<1x4xf32>, vector<4x2xf32>, vector<1x2xf32> -> vector<1x2xf32>
    %13 = arith.addf %10, %12 : vector<1x2xf32>
    %c0_9 = arith.constant 0 : index
    %c0_10 = arith.constant 0 : index
    %14 = vector.load %arg8[%c0_9, %c0_10] : memref<1x2xf32, #tpu.memory_space<vmem>>, vector<1x2xf32>
    tpu.vector_store %arg8[%c0_9, %c0_10], %13 {strides = array<i32>} : memref<1x2xf32, #tpu.memory_space<vmem>>, vector<1x2xf32>,
    %c0_11 = arith.constant 0 : index
    %c0_12 = arith.constant 0 : index
    %15 = vector.load %arg9[%c0_11, %c0_12] : memref<1x2xf32, #tpu.memory_space<vmem>>, vector<1x2xf32>
    %c0_13 = arith.constant 0 : index
    %c0_14 = arith.constant 0 : index
    %16 = vector.load %arg5[%c0_13, %c0_14] : memref<4x2xf32, #tpu.memory_space<vmem>>, vector<4x2xf32>
    %cst_15 = arith.constant dense<0.000000e+00> : vector<1x2xf32>
    %17 = tpu.matmul %9, %16, %cst_15 {dimension_numbers = #tpu.dot_dimension_numbers<[1], [0], [0], [1], [0, 0, 1, 1], [], []>, precision = #tpu.contract_precision<fp32>} : vector<1x4xf32>, vector<4x2xf32>, vector<1x2xf32> -> vector<1x2xf32>
    %18 = arith.addf %15, %17 : vector<1x2xf32>
    %c0_16 = arith.constant 0 : index
    %c0_17 = arith.constant 0 : index
    %19 = vector.load %arg9[%c0_16, %c0_17] : memref<1x2xf32, #tpu.memory_space<vmem>>, vector<1x2xf32>
    tpu.vector_store %arg9[%c0_16, %c0_17], %18 {strides = array<i32>} : memref<1x2xf32, #tpu.memory_space<vmem>>, vector<1x2xf32>,
    %c1_i32 = arith.constant 1 : i32
    %20 = arith.cmpi eq, %arg1, %c1_i32 : i32
    %21 = arith.extui %20 : i1 to i32
    %c0_i32_18 = arith.constant 0 : i32
    %22 = arith.cmpi ne, %21, %c0_i32_18 : i32
    scf.if %22 {
      %c0_19 = arith.constant 0 : index
      %c0_20 = arith.constant 0 : index
      %23 = vector.load %arg8[%c0_19, %c0_20] : memref<1x2xf32, #tpu.memory_space<vmem>>, vector<1x2xf32>
      %cst_21 = arith.constant 0.001953125 : f32
      %24 = vector.broadcast %cst_21 : f32 to vector<1x2xf32>
      %25 = arith.mulf %23, %24 : vector<1x2xf32>
      %c0_22 = arith.constant 0 : index
      %c0_23 = arith.constant 0 : index
      %26 = vector.load %arg9[%c0_22, %c0_23] : memref<1x2xf32, #tpu.memory_space<vmem>>, vector<1x2xf32>
      %cst_24 = arith.constant 0.001953125 : f32
      %27 = vector.broadcast %cst_24 : f32 to vector<1x2xf32>
      %28 = arith.mulf %26, %27 : vector<1x2xf32>
      %29 = arith.mulf %25, %25 : vector<1x2xf32>
      %30 = arith.subf %28, %29 : vector<1x2xf32>
      %cst_25 = arith.constant 9.99999974E-6 : f32
      %31 = vector.broadcast %cst_25 : f32 to vector<1x2xf32>
      %32 = arith.addf %30, %31 : vector<1x2xf32>
      %33 = math.rsqrt %32 : vector<1x2xf32>
      %c0_26 = arith.constant 0 : index
      %c0_27 = arith.constant 0 : index
      %34 = vector.load %arg6[%c0_26, %c0_27] : memref<2x4xf32, #tpu.memory_space<vmem>>, vector<2x4xf32>
      %cst_28 = arith.constant dense<0.000000e+00> : vector<1x4xf32>
      %35 = tpu.matmul %25, %34, %cst_28 {dimension_numbers = #tpu.dot_dimension_numbers<[1], [0], [0], [1], [0, 0, 1, 1], [], []>, precision = #tpu.contract_precision<fp32>} : vector<1x2xf32>, vector<2x4xf32>, vector<1x4xf32> -> vector<1x4xf32>
      %c0_29 = arith.constant 0 : index
      %c0_30 = arith.constant 0 : index
      %36 = vector.load %arg6[%c0_29, %c0_30] : memref<2x4xf32, #tpu.memory_space<vmem>>, vector<2x4xf32>
      %cst_31 = arith.constant dense<0.000000e+00> : vector<1x4xf32>
      %37 = tpu.matmul %33, %36, %cst_31 {dimension_numbers = #tpu.dot_dimension_numbers<[1], [0], [0], [1], [0, 0, 1, 1], [], []>, precision = #tpu.contract_precision<fp32>} : vector<1x2xf32>, vector<2x4xf32>, vector<1x4xf32> -> vector<1x4xf32>
      %c0_32 = arith.constant 0 : index
      %c0_33 = arith.constant 0 : index
      %38 = vector.load %arg3[%c0_32, %c0_33] : memref<1x4xf32, #tpu.memory_space<vmem>>, vector<1x4xf32>
      %39 = arith.mulf %38, %37 : vector<1x4xf32>
      %c0_34 = arith.constant 0 : index
      %c0_35 = arith.constant 0 : index
      %40 = vector.load %arg4[%c0_34, %c0_35] : memref<1x4xf32, #tpu.memory_space<vmem>>, vector<1x4xf32>
      %41 = arith.mulf %35, %39 : vector<1x4xf32>
      %42 = arith.subf %40, %41 : vector<1x4xf32>
      %c0_36 = arith.constant 0 : index
      %c0_37 = arith.constant 0 : index
      %c0_38 = arith.constant 0 : index
      %43 = vector.load %arg7[%c0_36, %c0_37, %c0_38] : memref<1x2x4xf32, #tpu.memory_space<vmem>>, vector<1x1x4xf32>
      %44 = vector.shape_cast %43 : vector<1x1x4xf32> to vector<1x4xf32>
      %45 = vector.shape_cast %39 : vector<1x4xf32> to vector<1x1x4xf32>
      tpu.vector_store %arg7[%c0_36, %c0_37, %c0_38], %45 {strides = array<i32>} : memref<1x2x4xf32, #tpu.memory_space<vmem>>, vector<1x1x4xf32>,
      %c0_39 = arith.constant 0 : index
      %c1 = arith.constant 1 : index
      %c0_40 = arith.constant 0 : index
      %46 = vector.load %arg7[%c0_39, %c1, %c0_40] : memref<1x2x4xf32, #tpu.memory_space<vmem>>, vector<1x1x4xf32>
      %47 = vector.shape_cast %46 : vector<1x1x4xf32> to vector<1x4xf32>
      %48 = vector.shape_cast %42 : vector<1x4xf32> to vector<1x1x4xf32>
      tpu.vector_store %arg7[%c0_39, %c1, %c0_40], %48 {strides = array<i32>} : memref<1x2x4xf32, #tpu.memory_space<vmem>>, vector<1x1x4xf32>,
    } else {
    }
    return
  }
  func.func @transform_0(%arg0: i32, %arg1: i32) -> (i32, i32, i32) {
    %c0_i32 = arith.constant 0 : i32
    %c0_i32_0 = arith.constant 0 : i32
    return %arg0, %arg1, %c0_i32 : i32, i32, i32
  }
  func.func @transform_1(%arg0: i32, %arg1: i32) -> (i32, i32) {
    %c0_i32 = arith.constant 0 : i32
    %c0_i32_0 = arith.constant 0 : i32
    %c0_i32_1 = arith.constant 0 : i32
    return %c0_i32, %c0_i32_0 : i32, i32
  }
  func.func @transform_2(%arg0: i32, %arg1: i32) -> (i32, i32) {
    %c0_i32 = arith.constant 0 : i32
    %c0_i32_0 = arith.constant 0 : i32
    %c0_i32_1 = arith.constant 0 : i32
    return %c0_i32, %c0_i32_0 : i32, i32
  }
  func.func @transform_3(%arg0: i32, %arg1: i32) -> (i32, i32) {
    %c0_i32 = arith.constant 0 : i32
    %c0_i32_0 = arith.constant 0 : i32
    %c0_i32_1 = arith.constant 0 : i32
    return %c0_i32, %c0_i32_0 : i32, i32
  }
  func.func @transform_4(%arg0: i32, %arg1: i32) -> (i32, i32) {
    %c0_i32 = arith.constant 0 : i32
    %c0_i32_0 = arith.constant 0 : i32
    %c0_i32_1 = arith.constant 0 : i32
    return %c0_i32, %c0_i32_0 : i32, i32
  }
  func.func @transform_5(%arg0: i32, %arg1: i32) -> (i32, i32, i32) {
    %c0_i32 = arith.constant 0 : i32
    %c0_i32_0 = arith.constant 0 : i32
    %c0_i32_1 = arith.constant 0 : i32
    return %arg0, %c0_i32, %c0_i32_0 : i32, i32, i32
  }
}

</mosaic_0001>

<llo_original>
// kernel: tpu_custom_call.1
$region0: #{tpu_custom_call.1}
  #allocation0 [shape = 'u32[]', space=smem, size = 0x4, offset = 0x4, fixed_abs, tag = 'smem constant byte address 0x4 - core index']
  #allocation1 [shape = 'u32[144,128]{1,0:T(1,128)}', space=vmem, size = 0x12000, scoped, tag = 'internal scratch']
  #allocation2 [shape = 'f32[1,2]{1,0:T(1,128)}', space=vmem, size = 0x200, scoped, tag = 'scratch operand']
  #allocation3 [shape = 'f32[1,2]{1,0:T(1,128)}', space=vmem, size = 0x200, scoped, tag = 'scratch operand']
  %s0 = inlined_call_operand.vmem [shape: f32[2,256,4], index: 0, kind: input, shape index: {}]
  %s1 = inlined_call_operand.vmem [shape: f32[1,4], index: 1, kind: input, shape index: {}]
  %s2 = inlined_call_operand.vmem [shape: f32[1,4], index: 2, kind: input, shape index: {}]
  %s3 = inlined_call_operand.vmem [shape: f32[4,2], index: 3, kind: input, shape index: {}]
  %s4 = inlined_call_operand.vmem [shape: f32[2,4], index: 4, kind: input, shape index: {}]
  %s5 = inlined_call_operand.hbm [shape: f32[2,2,4], index: 5, kind: output, shape index: {}]
  %s6 = sld [smem:[#allocation0]]
  $region61: #{tpu_custom_call.1} parent=0
    _
  %s8 = ssub.s32 1, %s6
  %s9 = scalar_select 0, %s8, %s6
  $region1: #{tpu_custom_call.1} parent=0
    #allocation4 [shape = 'u8[2048]{0}', space=vmem, size = 0x800, scoped, tag = 'output window, operand 0']
    #allocation5 [shape = 's32[2]{0}', space=sflag, size = 0x8, scoped, tag = 'scoped memory for tpu_custom_call.1']
    %10 = vsyncpa [#allocation5], 0
    %s11 = scalar_lea.sflag [#allocation5], 1
    %12 = vsyncpa %s11, 0
    loop: start=0, step=1, limit=6
    $region2: #{tpu_custom_call.1} parent=1 // loop_pre_header
      _
    $region3: #{tpu_custom_call.1} parent=1 // loop_header
      %s14 = sphi 0, %s18
      %p15 = scmp.ge.s32.totalorder %s14, 6
      %s21 = sphi 0, %s33
      %s22 = sphi 0, %s29
      %s23 = sphi 0, %s21
      %s24 = sphi 0, %s22
      %s25 = sphi 0, %s23
      %s26 = sphi 0, %s24
      %s38 = sphi 0, %s40
      %s41 = sphi 0, %s38
      %s42 = sphi 0, %s41
      %s58 = sphi 0, %s42
      %s62 = sphi 0, %s62
      %s64 = sphi 0, %s62
      %s65 = sphi 0, %s64
      %s79 = sphi 0, %s65
      %s83 = sphi 0, %s83
      %s85 = sphi 0, %s83
      %s86 = sphi 0, %s85
      %s100 = sphi 0, %s86
      %s104 = sphi 0, %s104
      %s106 = sphi 0, %s104
      %s107 = sphi 0, %s106
      %s121 = sphi 0, %s107
      %s125 = sphi 0, %s125
      %s127 = sphi 0, %s125
      %s128 = sphi 0, %s127
      %s142 = sphi 0, %s128
      %s148 = sphi 0, %s150
      %s151 = sphi 0, %s148
      %s152 = sphi 0, %s151
      %s168 = sphi 0, %s152
    $region4: #{tpu_custom_call.1} parent=1 // loop_header_branch
      %17 = sbr.rel (%p15) target = $region8
    $region5: #{tpu_custom_call.1} parent=1 // loop_body
      %s19 = ssub.s32 %s14, 1
      %s20 = ssub.s32 %s14, 2
      %s27 = sadd.s32 1, %s22
      %p28 = scmp.ge.s32.totalorder %s27, 2
      %s29 = scalar_select %p28, 0, %s27
      %s30 = sadd.s32 1, %s21
      %s31 = scalar_select %p28, %s30, %s21
      %p32 = scmp.ge.s32.totalorder %s31, 2
      %s33 = scalar_select %p32, 0, %s31
      %s34 = ssub.s32 %s21, %s33
      %s35 = ssub.s32 %s22, %s29
      %s36 = sor.u32 %s34, %s35
      %p37 = scmp.eq.s32.totalorder %s36, 0
      %s39 = sadd.s32 %s38, 1
      %s40 = scalar_select %p37, %s38, %s39
      %p43 = pneg %p37
      %p44 = scmp.eq.s32.totalorder %s14, 3
      %p45 = por %p43, %p44
      %p46 = scmp.ne.s32.totalorder %s38, %s41
      %p47 = scmp.eq.s32.totalorder %s14, 0
      %p48 = por %p46, %p47
      %p49 = scmp.ne.s32.totalorder %s38, %s41
      %p50 = scmp.eq.s32.totalorder %s19, 3
      %p51 = por %p49, %p50
      %p52 = scmp.ne.s32.totalorder %s41, %s42
      %p53 = scmp.eq.s32.totalorder %s19, 0
      %p54 = por %p52, %p53
      %p55 = scmp.ne.s32.totalorder %s41, %s42
      %p56 = scmp.eq.s32.totalorder %s20, 3
      %p57 = por %p55, %p56
      %p59 = scmp.ne.s32.totalorder %s42, %s58
      %p60 = scmp.eq.s32.totalorder %s20, 0
      %p61 = por %p59, %p60
      %s63 = sadd.s32 %s62, 1
      %p66 = scmp.eq.s32.totalorder %s14, 3
      %p67 = scmp.ne.s32.totalorder %s62, %s64
      %p68 = scmp.eq.s32.totalorder %s14, 0
      %p69 = por %p67, %p68
      %p70 = scmp.ne.s32.totalorder %s62, %s64
      %p71 = scmp.eq.s32.totalorder %s19, 3
      %p72 = por %p70, %p71
      %p73 = scmp.ne.s32.totalorder %s64, %s65
      %p74 = scmp.eq.s32.totalorder %s19, 0
      %p75 = por %p73, %p74
      %p76 = scmp.ne.s32.totalorder %s64, %s65
      %p77 = scmp.eq.s32.totalorder %s20, 3
      %p78 = por %p76, %p77
      %p80 = scmp.ne.s32.totalorder %s65, %s79
      %p81 = scmp.eq.s32.totalorder %s20, 0
      %p82 = por %p80, %p81
      %s84 = sadd.s32 %s83, 1
      %p87 = scmp.eq.s32.totalorder %s14, 3
      %p88 = scmp.ne.s32.totalorder %s83, %s85
      %p89 = scmp.eq.s32.totalorder %s14, 0
      %p90 = por %p88, %p89
      %p91 = scmp.ne.s32.totalorder %s83, %s85
      %p92 = scmp.eq.s32.totalorder %s19, 3
      %p93 = por %p91, %p92
      %p94 = scmp.ne.s32.totalorder %s85, %s86
      %p95 = scmp.eq.s32.totalorder %s19, 0
      %p96 = por %p94, %p95
      %p97 = scmp.ne.s32.totalorder %s85, %s86
      %p98 = scmp.eq.s32.totalorder %s20, 3
      %p99 = por %p97, %p98
      %p101 = scmp.ne.s32.totalorder %s86, %s100
      %p102 = scmp.eq.s32.totalorder %s20, 0
      %p103 = por %p101, %p102
      %s105 = sadd.s32 %s104, 1
      %p108 = scmp.eq.s32.totalorder %s14, 3
      %p109 = scmp.ne.s32.totalorder %s104, %s106
      %p110 = scmp.eq.s32.totalorder %s14, 0
      %p111 = por %p109, %p110
      %p112 = scmp.ne.s32.totalorder %s104, %s106
      %p113 = scmp.eq.s32.totalorder %s19, 3
      %p114 = por %p112, %p113
      %p115 = scmp.ne.s32.totalorder %s106, %s107
      %p116 = scmp.eq.s32.totalorder %s19, 0
      %p117 = por %p115, %p116
      %p118 = scmp.ne.s32.totalorder %s106, %s107
      %p119 = scmp.eq.s32.totalorder %s20, 3
      %p120 = por %p118, %p119
      %p122 = scmp.ne.s32.totalorder %s107, %s121
      %p123 = scmp.eq.s32.totalorder %s20, 0
      %p124 = por %p122, %p123
      %s126 = sadd.s32 %s125, 1
      %p129 = scmp.eq.s32.totalorder %s14, 3
      %p130 = scmp.ne.s32.totalorder %s125, %s127
      %p131 = scmp.eq.s32.totalorder %s14, 0
      %p132 = por %p130, %p131
      %p133 = scmp.ne.s32.totalorder %s125, %s127
      %p134 = scmp.eq.s32.totalorder %s19, 3
      %p135 = por %p133, %p134
      %p136 = scmp.ne.s32.totalorder %s127, %s128
      %p137 = scmp.eq.s32.totalorder %s19, 0
      %p138 = por %p136, %p137
      %p139 = scmp.ne.s32.totalorder %s127, %s128
      %p140 = scmp.eq.s32.totalorder %s20, 3
      %p141 = por %p139, %p140
      %p143 = scmp.ne.s32.totalorder %s128, %s142
      %p144 = scmp.eq.s32.totalorder %s20, 0
      %p145 = por %p143, %p144
      %s146 = ssub.s32 %s21, %s33
      %p147 = scmp.eq.s32.totalorder %s146, 0
      %s149 = sadd.s32 %s148, 1
      %s150 = scalar_select %p147, %s148, %s149
      %p153 = pneg %p147
      %p154 = scmp.eq.s32.totalorder %s14, 3
      %p155 = por %p153, %p154
      %p156 = scmp.ne.s32.totalorder %s148, %s151
      %p157 = scmp.eq.s32.totalorder %s14, 0
      %p158 = por %p156, %p157
      %p159 = scmp.ne.s32.totalorder %s148, %s151
      %p160 = scmp.eq.s32.totalorder %s19, 3
      %p161 = por %p159, %p160
      %p162 = scmp.ne.s32.totalorder %s151, %s152
      %p163 = scmp.eq.s32.totalorder %s19, 0
      %p164 = por %p162, %p163
      %p165 = scmp.ne.s32.totalorder %s151, %s152
      %p166 = scmp.eq.s32.totalorder %s20, 3
      %p167 = por %p165, %p166
      %p169 = scmp.ne.s32.totalorder %s152, %s168
      %p170 = scmp.eq.s32.totalorder %s20, 0
      %p171 = por %p169, %p170
      %p172 = scmp.le.s32.totalorder 1, %s14
      %p173 = scmp.lt.s32.totalorder %s14, 5
      %p174 = pnand %p172, %p173
      %p175 = pneg %p174
      // Predicated region
      $region9: #{tpu_custom_call.1} parent=5 // pred_check
        _
      $region10: #{tpu_custom_call.1} parent=5 // pred_check_branch
        %177 = sbr.rel (%p174) target = $region12
      $region11: #{tpu_custom_call.1} parent=5 // pred_region
        %s178 = ssub.s32 %s14, 1
        // Predicated region
        $region13: #{tpu_custom_call.1} parent=11 // pred_check
          %p179 = pneg %p75
        $region14: #{tpu_custom_call.1} parent=11 // pred_check_branch
          %181 = sbr.rel (%p179) target = $region16
        $region15: #{tpu_custom_call.1} parent=11 // pred_region
          _
        $region16: #{tpu_custom_call.1} parent=11 // pred_fallthru
          _
        // Predicated region
        $region17: #{tpu_custom_call.1} parent=11 // pred_check
          %p182 = pneg %p96
        $region18: #{tpu_custom_call.1} parent=11 // pred_check_branch
          %184 = sbr.rel (%p182) target = $region20
        $region19: #{tpu_custom_call.1} parent=11 // pred_region
          _
        $region20: #{tpu_custom_call.1} parent=11 // pred_fallthru
          _
        // Predicated region
        $region21: #{tpu_custom_call.1} parent=11 // pred_check
          %p185 = pneg %p117
        $region22: #{tpu_custom_call.1} parent=11 // pred_check_branch
          %187 = sbr.rel (%p185) target = $region24
        $region23: #{tpu_custom_call.1} parent=11 // pred_region
          _
        $region24: #{tpu_custom_call.1} parent=11 // pred_fallthru
          _
        // Predicated region
        $region25: #{tpu_custom_call.1} parent=11 // pred_check
          %p188 = pneg %p138
        $region26: #{tpu_custom_call.1} parent=11 // pred_check_branch
          %190 = sbr.rel (%p188) target = $region28
        $region27: #{tpu_custom_call.1} parent=11 // pred_region
          _
        $region28: #{tpu_custom_call.1} parent=11 // pred_fallthru
          _
      $region12: #{tpu_custom_call.1} parent=5 // pred_fallthru
        _
      %p191 = scmp.lt.s32.totalorder %s14, 4
      // Predicated region
      $region29: #{tpu_custom_call.1} parent=5 // pred_check
        %p192 = pneg %p191
      $region30: #{tpu_custom_call.1} parent=5 // pred_check_branch
        %194 = sbr.rel (%p192) target = $region32
      $region31: #{tpu_custom_call.1} parent=5 // pred_region
        // Predicated region
        $region33: #{tpu_custom_call.1} parent=31 // pred_check
          %p195 = pneg %p48
        $region34: #{tpu_custom_call.1} parent=31 // pred_check_branch
          %197 = sbr.rel (%p195) target = $region36
        $region35: #{tpu_custom_call.1} parent=31 // pred_region
          %s198 = smul.u32 16, %s22
          %p199 = scmp.lt.s32.totalorder %s21, 1
          %s200 = scalar_select %p199, %s21, 1
          %p201 = scmp.lt.s32.totalorder %s198, 31
          %s202 = scalar_select %p201, %s198, 31
          %s203 = smul.addr %s200, 32
          %s204 = sadd.s32 %s202, %s203
          %s205 = smul.addr %s204, 8
          %s206 = scalar_lea.vmem %s0, %s205
          %s207 = smul.u32 16, %s22
        $region36: #{tpu_custom_call.1} parent=31 // pred_fallthru
          _
      $region32: #{tpu_custom_call.1} parent=5 // pred_fallthru
        _
      %p208 = scmp.le.s32.totalorder 1, %s14
      %p209 = scmp.lt.s32.totalorder %s14, 5
      %p210 = pnand %p208, %p209
      %p211 = pneg %p210
      // Predicated region
      $region37: #{tpu_custom_call.1} parent=5 // pred_check
        _
      $region38: #{tpu_custom_call.1} parent=5 // pred_check_branch
        %213 = sbr.rel (%p210) target = $region40
      $region39: #{tpu_custom_call.1} parent=5 // pred_region
        %s214 = ssub.s32 %s14, 1
        %s215 = smul.u32 16, %s24
        %p216 = scmp.lt.s32.totalorder %s23, 1
        %s217 = scalar_select %p216, %s23, 1
        %p218 = scmp.lt.s32.totalorder %s215, 31
        %s219 = scalar_select %p218, %s215, 31
        %s220 = smul.addr %s217, 32
        %s221 = sadd.s32 %s219, %s220
        %s222 = smul.addr %s221, 8
        %s223 = scalar_lea.vmem %s0, %s222
        %p224 = pneg %p54
        %p225 = pneg %p51
        %p226 = pneg %p75
        %p227 = pneg %p72
        %p228 = pneg %p96
        %p229 = pneg %p93
        %p230 = pneg %p117
        %p231 = pneg %p114
        %p232 = pneg %p138
        %p233 = pneg %p135
        %p234 = pneg %p164
        %p235 = pneg %p161
        %s236 = sand.u32 %s151, 1
        %s237 = scalar_lea.sflag [#allocation5], %s236
        %s238 = sand.u32 %s151, 1
        %s239 = smul.addr %s238, 2
        %s240 = scalar_lea.vmem [#allocation4], %s239
        %s241 = smul.u32 16, %s24
        %p242 = scmp.lt.s32.totalorder %s23, 1
        %s243 = scalar_select %p242, %s23, 1
        %p244 = scmp.lt.s32.totalorder %s241, 31
        %s245 = scalar_select %p244, %s241, 31
        %s246 = smul.addr %s243, 32
        %s247 = sadd.s32 %s245, %s246
        %s248 = smul.addr %s247, 8
        %s249 = scalar_lea.vmem %s0, %s248
        %s250 = smul.u32 16, %s24
        %p251 = scmp.eq.s32.totalorder %s24, 0
        // Predicated region
        $region41: #{tpu_custom_call.1} parent=39 // pred_check
          %p252 = pneg %p251
        $region42: #{tpu_custom_call.1} parent=39 // pred_check_branch
          %254 = sbr.rel (%p252) target = $region44
        $region43: #{tpu_custom_call.1} parent=39 // pred_region
          %vm255 = vcmask 8192
          %256 = vst.msk [vmem:[#allocation2] sm:$0x1] %vm255, 0.0
          %257 = vst.msk [vmem:[#allocation3] sm:$0x1] %vm255, 0.0
        $region44: #{tpu_custom_call.1} parent=39 // pred_fallthru
          _
        %v258 = vld [vmem:[%s249] sm:$0xff]
        %v259 = vld [vmem:[%s249 + $0x8] sm:$0xff]
        %v260 = vld [vmem:[%s249 + $0x10] sm:$0xff]
        %v261 = vld [vmem:[%s249 + $0x18] sm:$0xff]
        %v262 = vld [vmem:[%s249 + $0x20] sm:$0xff]
        %v263 = vld [vmem:[%s249 + $0x28] sm:$0xff]
        %v264 = vld [vmem:[%s249 + $0x30] sm:$0xff]
        %v265 = vld [vmem:[%s249 + $0x38] sm:$0xff]
        %v266 = vld [vmem:[%s249 + $0x40] sm:$0xff]
        %v267 = vld [vmem:[%s249 + $0x48] sm:$0xff]
        %v268 = vld [vmem:[%s249 + $0x50] sm:$0xff]
        %v269 = vld [vmem:[%s249 + $0x58] sm:$0xff]
        %v270 = vld [vmem:[%s249 + $0x60] sm:$0xff]
        %v271 = vld [vmem:[%s249 + $0x68] sm:$0xff]
        %v272 = vld [vmem:[%s249 + $0x70] sm:$0xff]
        %v273 = vld [vmem:[%s249 + $0x78] sm:$0xff]
        %vm274 = vcmask 31744
        %v275 = vsel %vm274, %v258, 0.0
        %v276 = vsel %vm274, %v259, 0.0
        %v277 = vadd.f32 %v275, %v276
        %v278 = vsel %vm274, %v260, 0.0
        %v279 = vadd.f32 %v277, %v278
        %v280 = vsel %vm274, %v261, 0.0
        %v281 = vadd.f32 %v279, %v280
        %v282 = vsel %vm274, %v262, 0.0
        %v283 = vadd.f32 %v281, %v282
        %v284 = vsel %vm274, %v263, 0.0
        %v285 = vadd.f32 %v283, %v284
        %v286 = vsel %vm274, %v264, 0.0
        %v287 = vadd.f32 %v285, %v286
        %v288 = vsel %vm274, %v265, 0.0
        %v289 = vadd.f32 %v287, %v288
        %v290 = vsel %vm274, %v266, 0.0
        %v291 = vadd.f32 %v289, %v290
        %v292 = vsel %vm274, %v267, 0.0
        %v293 = vadd.f32 %v291, %v292
        %v294 = vsel %vm274, %v268, 0.0
        %v295 = vadd.f32 %v293, %v294
        %v296 = vsel %vm274, %v269, 0.0
        %v297 = vadd.f32 %v295, %v296
        %v298 = vsel %vm274, %v270, 0.0
        %v299 = vadd.f32 %v297, %v298
        %v300 = vsel %vm274, %v271, 0.0
        %v301 = vadd.f32 %v299, %v300
        %v302 = vsel %vm274, %v272, 0.0
        %v303 = vadd.f32 %v301, %v302
        %v304 = vsel %vm274, %v273, 0.0
        %v305 = vadd.f32 %v303, %v304
        %v306 = vrot.slane %v305, 4
        %v307 = vadd.f32 %v305, %v306
        %v308 = vrot.slane %v307, 2
        %v309 = vadd.f32 %v307, %v308
        %v310 = vrot.slane %v309, 1
        %v311 = vadd.f32 %v309, %v310
        %v312 = vmul.f32 %v258, %v258
        %v313 = vmul.f32 %v259, %v259
        %v314 = vmul.f32 %v260, %v260
        %v315 = vmul.f32 %v261, %v261
        %v316 = vmul.f32 %v262, %v262
        %v317 = vmul.f32 %v263, %v263
        %v318 = vmul.f32 %v264, %v264
        %v319 = vmul.f32 %v265, %v265
        %v320 = vmul.f32 %v266, %v266
        %v321 = vmul.f32 %v267, %v267
        %v322 = vmul.f32 %v268, %v268
        %v323 = vmul.f32 %v269, %v269
        %v324 = vmul.f32 %v270, %v270
        %v325 = vmul.f32 %v271, %v271
        %v326 = vmul.f32 %v272, %v272
        %v327 = vmul.f32 %v273, %v273
        %v328 = vsel %vm274, %v312, 0.0
        %v329 = vsel %vm274, %v313, 0.0
        %v330 = vadd.f32 %v328, %v329
        %v331 = vsel %vm274, %v314, 0.0
        %v332 = vadd.f32 %v330, %v331
        %v333 = vsel %vm274, %v315, 0.0
        %v334 = vadd.f32 %v332, %v333
        %v335 = vsel %vm274, %v316, 0.0
        %v336 = vadd.f32 %v334, %v335
        %v337 = vsel %vm274, %v317, 0.0
        %v338 = vadd.f32 %v336, %v337
        %v339 = vsel %vm274, %v318, 0.0
        %v340 = vadd.f32 %v338, %v339
        %v341 = vsel %vm274, %v319, 0.0
        %v342 = vadd.f32 %v340, %v341
        %v343 = vsel %vm274, %v320, 0.0
        %v344 = vadd.f32 %v342, %v343
        %v345 = vsel %vm274, %v321, 0.0
        %v346 = vadd.f32 %v344, %v345
        %v347 = vsel %vm274, %v322, 0.0
        %v348 = vadd.f32 %v346, %v347
        %v349 = vsel %vm274, %v323, 0.0
        %v350 = vadd.f32 %v348, %v349
        %v351 = vsel %vm274, %v324, 0.0
        %v352 = vadd.f32 %v350, %v351
        %v353 = vsel %vm274, %v325, 0.0
        %v354 = vadd.f32 %v352, %v353
        %v355 = vsel %vm274, %v326, 0.0
        %v356 = vadd.f32 %v354, %v355
        %v357 = vsel %vm274, %v327, 0.0
        %v358 = vadd.f32 %v356, %v357
        %v359 = vrot.slane %v358, 4
        %v360 = vadd.f32 %v358, %v359
        %v361 = vrot.slane %v360, 2
        %v362 = vadd.f32 %v360, %v361
        %v363 = vrot.slane %v362, 1
        %v364 = vadd.f32 %v362, %v363
        %v365 = vld [vmem:[#allocation2] sm:$0x1]
        %v366 = vld [vmem:[%s3] sm:$0xf]
        %v368 = vsel %vm274, %v311, 0
        %vm370 = vcmask 1043456
        %v372 = vsel %vm370, %v366, 0
        %374 = vmatprep.subr.mxu0 0.0
        %v375 = vand.u32 %v372, 4294901760
        %376 = vmatpush1.msra.mxu0 %v375
        %377 = vmatprep.subr.mxu0 0.0
        %378 = vmatpush1.msra.mxu0 0.0
        %379 = vmatprep.subr.mxu0 0.0
        %380 = vmatpush1.msra.mxu0 0.0
        %381 = vmatprep.subr.mxu0 0.0
        %382 = vmatpush1.msra.mxu0 0.0
        %383 = vmatprep.subr.mxu0 0.0
        %384 = vmatpush1.msra.mxu0 0.0
        %385 = vmatprep.subr.mxu0 0.0
        %386 = vmatpush1.msra.mxu0 0.0
        %387 = vmatprep.subr.mxu0 0.0
        %388 = vmatpush1.msra.mxu0 0.0
        %389 = vmatprep.subr.mxu0 0.0
        %390 = vmatpush1.msra.mxu0 0.0
        %391 = vmatprep.subr.mxu0 0.0
        %392 = vmatpush1.msra.mxu0 0.0
        %393 = vmatprep.subr.mxu0 0.0
        %394 = vmatpush1.msra.mxu0 0.0
        %395 = vmatprep.subr.mxu0 0.0
        %396 = vmatpush1.msra.mxu0 0.0
        %397 = vmatprep.subr.mxu0 0.0
        %398 = vmatpush1.msra.mxu0 0.0
        %399 = vmatprep.subr.mxu0 0.0
        %400 = vmatpush1.msra.mxu0 0.0
        %401 = vmatprep.subr.mxu0 0.0
        %402 = vmatpush1.msra.mxu0 0.0
        %403 = vmatprep.subr.mxu0 0.0
        %404 = vmatpush1.msra.mxu0 0.0
        %405 = vmatprep.subr.mxu0 0.0
        %406 = vmatpush1.msra.mxu0 0.0
        %407 = vmatprep.subr.mxu0 0.0
        %408 = vmatpush1.msra.mxu0 0.0
        %409 = vmatprep.subr.mxu0 0.0
        %410 = vmatpush1.msra.mxu0 0.0
        %411 = vmatprep.subr.mxu0 0.0
        %412 = vmatpush1.msra.mxu0 0.0
        %413 = vmatprep.subr.mxu0 0.0
        %414 = vmatpush1.msra.mxu0 0.0
        %415 = vmatprep.subr.mxu0 0.0
        %416 = vmatpush1.msra.mxu0 0.0
        %417 = vmatprep.subr.mxu0 0.0
        %418 = vmatpush1.msra.mxu0 0.0
        %419 = vmatprep.subr.mxu0 0.0
        %420 = vmatpush1.msra.mxu0 0.0
        %421 = vmatprep.subr.mxu0 0.0
        %422 = vmatpush1.msra.mxu0 0.0
        %423 = vmatprep.subr.mxu0 0.0
        %424 = vmatpush1.msra.mxu0 0.0
        %425 = vmatprep.subr.mxu0 0.0
        %426 = vmatpush1.msra.mxu0 0.0
        %427 = vmatprep.subr.mxu0 0.0
        %428 = vmatpush1.msra.mxu0 0.0
        %429 = vmatprep.subr.mxu0 0.0
        %430 = vmatpush1.msra.mxu0 0.0
        %431 = vmatprep.subr.mxu0 0.0
        %432 = vmatpush1.msra.mxu0 0.0
        %433 = vmatprep.subr.mxu0 0.0
        %434 = vmatpush1.msra.mxu0 0.0
        %435 = vmatprep.subr.mxu0 0.0
        %436 = vmatpush1.msra.mxu0 0.0
        %437 = vmatprep.subr.mxu0 0.0
        %438 = vmatpush1.msra.mxu0 0.0
        %439 = vmatprep.mubr.f32.mxu0 0.0
        %v440 = vand.u32 %v368, 4294901760
        %v441 = vsub.f32 %v368, %v440
        %v442 = vand.u32 %v441, 4294901760
        %v443 = vsub.f32 %v441, %v442
        %v444 = vand.u32 %v443, 4294901760
        %445 = vmatmul.mubr.f32.gmra.mrb[0].mxu0 %v444
        %v446 = vpop.f32.mrb[0].mxu0
        %v447 = vadd.f32 0.0, %v446
        %v448 = vpop.f32.mrb[0].mxu0
        %449 = vdwg.mxu0
        %450 = vmatprep.subr.mxu0 0.0
        %v451 = vand.u32 %v372, 4294901760
        %v452 = vsub.f32 %v372, %v451
        %v453 = vand.u32 %v452, 4294901760
        %v454 = vsub.f32 %v452, %v453
        %v455 = vand.u32 %v454, 4294901760
        %456 = vmatpush1.msra.mxu0 %v455
        %457 = vmatprep.subr.mxu0 0.0
        %458 = vmatpush1.msra.mxu0 0.0
        %459 = vmatprep.subr.mxu0 0.0
        %460 = vmatpush1.msra.mxu0 0.0
        %461 = vmatprep.subr.mxu0 0.0
        %462 = vmatpush1.msra.mxu0 0.0
        %463 = vmatprep.subr.mxu0 0.0
        %464 = vmatpush1.msra.mxu0 0.0
        %465 = vmatprep.subr.mxu0 0.0
        %466 = vmatpush1.msra.mxu0 0.0
        %467 = vmatprep.subr.mxu0 0.0
        %468 = vmatpush1.msra.mxu0 0.0
        %469 = vmatprep.subr.mxu0 0.0
        %470 = vmatpush1.msra.mxu0 0.0
        %471 = vmatprep.subr.mxu0 0.0
        %472 = vmatpush1.msra.mxu0 0.0
        %473 = vmatprep.subr.mxu0 0.0
        %474 = vmatpush1.msra.mxu0 0.0
        %475 = vmatprep.subr.mxu0 0.0
        %476 = vmatpush1.msra.mxu0 0.0
        %477 = vmatprep.subr.mxu0 0.0
        %478 = vmatpush1.msra.mxu0 0.0
        %479 = vmatprep.subr.mxu0 0.0
        %480 = vmatpush1.msra.mxu0 0.0
        %481 = vmatprep.subr.mxu0 0.0
        %482 = vmatpush1.msra.mxu0 0.0
        %483 = vmatprep.subr.mxu0 0.0
        %484 = vmatpush1.msra.mxu0 0.0
        %485 = vmatprep.subr.mxu0 0.0
        %486 = vmatpush1.msra.mxu0 0.0
        %487 = vmatprep.subr.mxu0 0.0
        %488 = vmatpush1.msra.mxu0 0.0
        %489 = vmatprep.subr.mxu0 0.0
        %490 = vmatpush1.msra.mxu0 0.0
        %491 = vmatprep.subr.mxu0 0.0
        %492 = vmatpush1.msra.mxu0 0.0
        %493 = vmatprep.subr.mxu0 0.0
        %494 = vmatpush1.msra.mxu0 0.0
        %495 = vmatprep.subr.mxu0 0.0
        %496 = vmatpush1.msra.mxu0 0.0
        %497 = vmatprep.subr.mxu0 0.0
        %498 = vmatpush1.msra.mxu0 0.0
        %499 = vmatprep.subr.mxu0 0.0
        %500 = vmatpush1.msra.mxu0 0.0
        %501 = vmatprep.subr.mxu0 0.0
        %502 = vmatpush1.msra.mxu0 0.0
        %503 = vmatprep.subr.mxu0 0.0
        %504 = vmatpush1.msra.mxu0 0.0
        %505 = vmatprep.subr.mxu0 0.0
        %506 = vmatpush1.msra.mxu0 0.0
        %507 = vmatprep.subr.mxu0 0.0
        %508 = vmatpush1.msra.mxu0 0.0
        %509 = vmatprep.subr.mxu0 0.0
        %510 = vmatpush1.msra.mxu0 0.0
        %511 = vmatprep.subr.mxu0 0.0
        %512 = vmatpush1.msra.mxu0 0.0
        %513 = vmatprep.subr.mxu0 0.0
        %514 = vmatpush1.msra.mxu0 0.0
        %515 = vmatprep.subr.mxu0 0.0
        %516 = vmatpush1.msra.mxu0 0.0
        %517 = vmatprep.subr.mxu0 0.0
        %518 = vmatpush1.msra.mxu0 0.0
        %519 = vmatprep.mubr.f32.mxu0 0.0
        %v520 = vand.u32 %v368, 4294901760
        %521 = vmatmul.mubr.f32.gmra.mrb[0].mxu0 %v520
        %v522 = vpop.f32.mrb[0].mxu0
        %v523 = vadd.f32 %v447, %v522
        %v524 = vpop.f32.mrb[0].mxu0
        %525 = vdwg.mxu0
        %526 = vmatprep.subr.mxu0 0.0
        %v527 = vand.u32 %v372, 4294901760
        %v528 = vsub.f32 %v372, %v527
        %529 = vmatpush1.msra.mxu0 %v528
        %530 = vmatprep.subr.mxu0 0.0
        %531 = vmatpush1.msra.mxu0 0.0
        %532 = vmatprep.subr.mxu0 0.0
        %533 = vmatpush1.msra.mxu0 0.0
        %534 = vmatprep.subr.mxu0 0.0
        %535 = vmatpush1.msra.mxu0 0.0
        %536 = vmatprep.subr.mxu0 0.0
        %537 = vmatpush1.msra.mxu0 0.0
        %538 = vmatprep.subr.mxu0 0.0
        %539 = vmatpush1.msra.mxu0 0.0
        %540 = vmatprep.subr.mxu0 0.0
        %541 = vmatpush1.msra.mxu0 0.0
        %542 = vmatprep.subr.mxu0 0.0
        %543 = vmatpush1.msra.mxu0 0.0
        %544 = vmatprep.subr.mxu0 0.0
        %545 = vmatpush1.msra.mxu0 0.0
        %546 = vmatprep.subr.mxu0 0.0
        %547 = vmatpush1.msra.mxu0 0.0
        %548 = vmatprep.subr.mxu0 0.0
        %549 = vmatpush1.msra.mxu0 0.0
        %550 = vmatprep.subr.mxu0 0.0
        %551 = vmatpush1.msra.mxu0 0.0
        %552 = vmatprep.subr.mxu0 0.0
        %553 = vmatpush1.msra.mxu0 0.0
        %554 = vmatprep.subr.mxu0 0.0
        %555 = vmatpush1.msra.mxu0 0.0
        %556 = vmatprep.subr.mxu0 0.0
        %557 = vmatpush1.msra.mxu0 0.0
        %558 = vmatprep.subr.mxu0 0.0
        %559 = vmatpush1.msra.mxu0 0.0
        %560 = vmatprep.subr.mxu0 0.0
        %561 = vmatpush1.msra.mxu0 0.0
        %562 = vmatprep.subr.mxu0 0.0
        %563 = vmatpush1.msra.mxu0 0.0
        %564 = vmatprep.subr.mxu0 0.0
        %565 = vmatpush1.msra.mxu0 0.0
        %566 = vmatprep.subr.mxu0 0.0
        %567 = vmatpush1.msra.mxu0 0.0
        %568 = vmatprep.subr.mxu0 0.0
        %569 = vmatpush1.msra.mxu0 0.0
        %570 = vmatprep.subr.mxu0 0.0
        %571 = vmatpush1.msra.mxu0 0.0
        %572 = vmatprep.subr.mxu0 0.0
        %573 = vmatpush1.msra.mxu0 0.0
        %574 = vmatprep.subr.mxu0 0.0
        %575 = vmatpush1.msra.mxu0 0.0
        %576 = vmatprep.subr.mxu0 0.0
        %577 = vmatpush1.msra.mxu0 0.0
        %578 = vmatprep.subr.mxu0 0.0
        %579 = vmatpush1.msra.mxu0 0.0
        %580 = vmatprep.subr.mxu0 0.0
        %581 = vmatpush1.msra.mxu0 0.0
        %582 = vmatprep.subr.mxu0 0.0
        %583 = vmatpush1.msra.mxu0 0.0
        %584 = vmatprep.subr.mxu0 0.0
        %585 = vmatpush1.msra.mxu0 0.0
        %586 = vmatprep.subr.mxu0 0.0
        %587 = vmatpush1.msra.mxu0 0.0
        %588 = vmatprep.subr.mxu0 0.0
        %589 = vmatpush1.msra.mxu0 0.0
        %590 = vmatprep.subr.mxu0 0.0
        %591 = vmatpush1.msra.mxu0 0.0
        %592 = vmatprep.mubr.f32.mxu0 0.0
        %v593 = vand.u32 %v368, 4294901760
        %v594 = vsub.f32 %v368, %v593
        %595 = vmatmul.mubr.f32.gmra.mrb[0].mxu0 %v594
        %v596 = vpop.f32.mrb[0].mxu0
        %v597 = vadd.f32 %v523, %v596
        %v598 = vpop.f32.mrb[0].mxu0
        %599 = vdwg.mxu0
        %600 = vmatprep.subr.mxu0 0.0
        %v601 = vand.u32 %v372, 4294901760
        %602 = vmatpush1.msra.mxu0 %v601
        %603 = vmatprep.subr.mxu0 0.0
        %604 = vmatpush1.msra.mxu0 0.0
        %605 = vmatprep.subr.mxu0 0.0
        %606 = vmatpush1.msra.mxu0 0.0
        %607 = vmatprep.subr.mxu0 0.0
        %608 = vmatpush1.msra.mxu0 0.0
        %609 = vmatprep.subr.mxu0 0.0
        %610 = vmatpush1.msra.mxu0 0.0
        %611 = vmatprep.subr.mxu0 0.0
        %612 = vmatpush1.msra.mxu0 0.0
        %613 = vmatprep.subr.mxu0 0.0
        %614 = vmatpush1.msra.mxu0 0.0
        %615 = vmatprep.subr.mxu0 0.0
        %616 = vmatpush1.msra.mxu0 0.0
        %617 = vmatprep.subr.mxu0 0.0
        %618 = vmatpush1.msra.mxu0 0.0
        %619 = vmatprep.subr.mxu0 0.0
        %620 = vmatpush1.msra.mxu0 0.0
        %621 = vmatprep.subr.mxu0 0.0
        %622 = vmatpush1.msra.mxu0 0.0
        %623 = vmatprep.subr.mxu0 0.0
        %624 = vmatpush1.msra.mxu0 0.0
        %625 = vmatprep.subr.mxu0 0.0
        %626 = vmatpush1.msra.mxu0 0.0
        %627 = vmatprep.subr.mxu0 0.0
        %628 = vmatpush1.msra.mxu0 0.0
        %629 = vmatprep.subr.mxu0 0.0
        %630 = vmatpush1.msra.mxu0 0.0
        %631 = vmatprep.subr.mxu0 0.0
        %632 = vmatpush1.msra.mxu0 0.0
        %633 = vmatprep.subr.mxu0 0.0
        %634 = vmatpush1.msra.mxu0 0.0
        %635 = vmatprep.subr.mxu0 0.0
        %636 = vmatpush1.msra.mxu0 0.0
        %637 = vmatprep.subr.mxu0 0.0
        %638 = vmatpush1.msra.mxu0 0.0
        %639 = vmatprep.subr.mxu0 0.0
        %640 = vmatpush1.msra.mxu0 0.0
        %641 = vmatprep.subr.mxu0 0.0
        %642 = vmatpush1.msra.mxu0 0.0
        %643 = vmatprep.subr.mxu0 0.0
        %644 = vmatpush1.msra.mxu0 0.0
        %645 = vmatprep.subr.mxu0 0.0
        %646 = vmatpush1.msra.mxu0 0.0
        %647 = vmatprep.subr.mxu0 0.0
        %648 = vmatpush1.msra.mxu0 0.0
        %649 = vmatprep.subr.mxu0 0.0
        %650 = vmatpush1.msra.mxu0 0.0
        %651 = vmatprep.subr.mxu0 0.0
        %652 = vmatpush1.msra.mxu0 0.0
        %653 = vmatprep.subr.mxu0 0.0
        %654 = vmatpush1.msra.mxu0 0.0
        %655 = vmatprep.subr.mxu0 0.0
        %656 = vmatpush1.msra.mxu0 0.0
        %657 = vmatprep.subr.mxu0 0.0
        %658 = vmatpush1.msra.mxu0 0.0
        %659 = vmatprep.subr.mxu0 0.0
        %660 = vmatpush1.msra.mxu0 0.0
        %661 = vmatprep.subr.mxu0 0.0
        %662 = vmatpush1.msra.mxu0 0.0
        %663 = vmatprep.subr.mxu0 0.0
        %664 = vmatpush1.msra.mxu0 0.0
        %665 = vmatprep.mubr.f32.mxu0 0.0
        %v666 = vand.u32 %v368, 4294901760
        %v667 = vsub.f32 %v368, %v666
        %v668 = vand.u32 %v667, 4294901760
        %669 = vmatmul.mubr.f32.gmra.mrb[0].mxu0 %v668
        %v670 = vpop.f32.mrb[0].mxu0
        %v671 = vadd.f32 %v597, %v670
        %v672 = vpop.f32.mrb[0].mxu0
        %673 = vdwg.mxu0
        %674 = vmatprep.subr.mxu0 0.0
        %v675 = vand.u32 %v372, 4294901760
        %v676 = vsub.f32 %v372, %v675
        %v677 = vand.u32 %v676, 4294901760
        %678 = vmatpush1.msra.mxu0 %v677
        %679 = vmatprep.subr.mxu0 0.0
        %680 = vmatpush1.msra.mxu0 0.0
        %681 = vmatprep.subr.mxu0 0.0
        %682 = vmatpush1.msra.mxu0 0.0
        %683 = vmatprep.subr.mxu0 0.0
        %684 = vmatpush1.msra.mxu0 0.0
        %685 = vmatprep.subr.mxu0 0.0
        %686 = vmatpush1.msra.mxu0 0.0
        %687 = vmatprep.subr.mxu0 0.0
        %688 = vmatpush1.msra.mxu0 0.0
        %689 = vmatprep.subr.mxu0 0.0
        %690 = vmatpush1.msra.mxu0 0.0
        %691 = vmatprep.subr.mxu0 0.0
        %692 = vmatpush1.msra.mxu0 0.0
        %693 = vmatprep.subr.mxu0 0.0
        %694 = vmatpush1.msra.mxu0 0.0
        %695 = vmatprep.subr.mxu0 0.0
        %696 = vmatpush1.msra.mxu0 0.0
        %697 = vmatprep.subr.mxu0 0.0
        %698 = vmatpush1.msra.mxu0 0.0
        %699 = vmatprep.subr.mxu0 0.0
        %700 = vmatpush1.msra.mxu0 0.0
        %701 = vmatprep.subr.mxu0 0.0
        %702 = vmatpush1.msra.mxu0 0.0
        %703 = vmatprep.subr.mxu0 0.0
        %704 = vmatpush1.msra.mxu0 0.0
        %705 = vmatprep.subr.mxu0 0.0
        %706 = vmatpush1.msra.mxu0 0.0
        %707 = vmatprep.subr.mxu0 0.0
        %708 = vmatpush1.msra.mxu0 0.0
        %709 = vmatprep.subr.mxu0 0.0
        %710 = vmatpush1.msra.mxu0 0.0
        %711 = vmatprep.subr.mxu0 0.0
        %712 = vmatpush1.msra.mxu0 0.0
        %713 = vmatprep.subr.mxu0 0.0
        %714 = vmatpush1.msra.mxu0 0.0
        %715 = vmatprep.subr.mxu0 0.0
        %716 = vmatpush1.msra.mxu0 0.0
        %717 = vmatprep.subr.mxu0 0.0
        %718 = vmatpush1.msra.mxu0 0.0
        %719 = vmatprep.subr.mxu0 0.0
        %720 = vmatpush1.msra.mxu0 0.0
        %721 = vmatprep.subr.mxu0 0.0
        %722 = vmatpush1.msra.mxu0 0.0
        %723 = vmatprep.subr.mxu0 0.0
        %724 = vmatpush1.msra.mxu0 0.0
        %725 = vmatprep.subr.mxu0 0.0
        %726 = vmatpush1.msra.mxu0 0.0
        %727 = vmatprep.subr.mxu0 0.0
        %728 = vmatpush1.msra.mxu0 0.0
        %729 = vmatprep.subr.mxu0 0.0
        %730 = vmatpush1.msra.mxu0 0.0
        %731 = vmatprep.subr.mxu0 0.0
        %732 = vmatpush1.msra.mxu0 0.0
        %733 = vmatprep.subr.mxu0 0.0
        %734 = vmatpush1.msra.mxu0 0.0
        %735 = vmatprep.subr.mxu0 0.0
        %736 = vmatpush1.msra.mxu0 0.0
        %737 = vmatprep.subr.mxu0 0.0
        %738 = vmatpush1.msra.mxu0 0.0
        %739 = vmatprep.subr.mxu0 0.0
        %740 = vmatpush1.msra.mxu0 0.0
        %741 = vmatprep.mubr.f32.mxu0 0.0
        %v742 = vand.u32 %v368, 4294901760
        %743 = vmatmul.mubr.f32.gmra.mrb[0].mxu0 %v742
        %v744 = vpop.f32.mrb[0].mxu0
        %v745 = vadd.f32 %v671, %v744
        %v746 = vpop.f32.mrb[0].mxu0
        %747 = vdwg.mxu0
        %748 = vmatprep.subr.mxu0 0.0
        %v749 = vand.u32 %v372, 4294901760
        %750 = vmatpush1.msra.mxu0 %v749
        %751 = vmatprep.subr.mxu0 0.0
        %752 = vmatpush1.msra.mxu0 0.0
        %753 = vmatprep.subr.mxu0 0.0
        %754 = vmatpush1.msra.mxu0 0.0
        %755 = vmatprep.subr.mxu0 0.0
        %756 = vmatpush1.msra.mxu0 0.0
        %757 = vmatprep.subr.mxu0 0.0
        %758 = vmatpush1.msra.mxu0 0.0
        %759 = vmatprep.subr.mxu0 0.0
        %760 = vmatpush1.msra.mxu0 0.0
        %761 = vmatprep.subr.mxu0 0.0
        %762 = vmatpush1.msra.mxu0 0.0
        %763 = vmatprep.subr.mxu0 0.0
        %764 = vmatpush1.msra.mxu0 0.0
        %765 = vmatprep.subr.mxu0 0.0
        %766 = vmatpush1.msra.mxu0 0.0
        %767 = vmatprep.subr.mxu0 0.0
        %768 = vmatpush1.msra.mxu0 0.0
        %769 = vmatprep.subr.mxu0 0.0
        %770 = vmatpush1.msra.mxu0 0.0
        %771 = vmatprep.subr.mxu0 0.0
        %772 = vmatpush1.msra.mxu0 0.0
        %773 = vmatprep.subr.mxu0 0.0
        %774 = vmatpush1.msra.mxu0 0.0
        %775 = vmatprep.subr.mxu0 0.0
        %776 = vmatpush1.msra.mxu0 0.0
        %777 = vmatprep.subr.mxu0 0.0
        %778 = vmatpush1.msra.mxu0 0.0
        %779 = vmatprep.subr.mxu0 0.0
        %780 = vmatpush1.msra.mxu0 0.0
        %781 = vmatprep.subr.mxu0 0.0
        %782 = vmatpush1.msra.mxu0 0.0
        %783 = vmatprep.subr.mxu0 0.0
        %784 = vmatpush1.msra.mxu0 0.0
        %785 = vmatprep.subr.mxu0 0.0
        %786 = vmatpush1.msra.mxu0 0.0
        %787 = vmatprep.subr.mxu0 0.0
        %788 = vmatpush1.msra.mxu0 0.0
        %789 = vmatprep.subr.mxu0 0.0
        %790 = vmatpush1.msra.mxu0 0.0
        %791 = vmatprep.subr.mxu0 0.0
        %792 = vmatpush1.msra.mxu0 0.0
        %793 = vmatprep.subr.mxu0 0.0
        %794 = vmatpush1.msra.mxu0 0.0
        %795 = vmatprep.subr.mxu0 0.0
        %796 = vmatpush1.msra.mxu0 0.0
        %797 = vmatprep.subr.mxu0 0.0
        %798 = vmatpush1.msra.mxu0 0.0
        %799 = vmatprep.subr.mxu0 0.0
        %800 = vmatpush1.msra.mxu0 0.0
        %801 = vmatprep.subr.mxu0 0.0
        %802 = vmatpush1.msra.mxu0 0.0
        %803 = vmatprep.subr.mxu0 0.0
        %804 = vmatpush1.msra.mxu0 0.0
        %805 = vmatprep.subr.mxu0 0.0
        %806 = vmatpush1.msra.mxu0 0.0
        %807 = vmatprep.subr.mxu0 0.0
        %808 = vmatpush1.msra.mxu0 0.0
        %809 = vmatprep.subr.mxu0 0.0
        %810 = vmatpush1.msra.mxu0 0.0
        %811 = vmatprep.subr.mxu0 0.0
        %812 = vmatpush1.msra.mxu0 0.0
        %813 = vmatprep.mubr.f32.mxu0 0.0
        %v814 = vand.u32 %v368, 4294901760
        %815 = vmatmul.mubr.f32.gmra.mrb[0].mxu0 %v814
        %v816 = vpop.f32.mrb[0].mxu0
        %v817 = vadd.f32 %v745, %v816
        %v818 = vpop.f32.mrb[0].mxu0
        %819 = vdwg.mxu0
        %v820 = vadd.f32 %v365, %v817
        %vm821 = vcmask 8192
        %822 = vst.msk [vmem:[#allocation2] sm:$0x1] %vm821, %v820
        %v823 = vld [vmem:[#allocation3] sm:$0x1]
        %v824 = vld [vmem:[%s3] sm:$0xf]
        %v826 = vsel %vm274, %v364, 0
        %v829 = vsel %vm370, %v824, 0
        %831 = vmatprep.subr.mxu0 0.0
        %v832 = vand.u32 %v829, 4294901760
        %833 = vmatpush1.msra.mxu0 %v832
        %834 = vmatprep.subr.mxu0 0.0
        %835 = vmatpush1.msra.mxu0 0.0
        %836 = vmatprep.subr.mxu0 0.0
        %837 = vmatpush1.msra.mxu0 0.0
        %838 = vmatprep.subr.mxu0 0.0
        %839 = vmatpush1.msra.mxu0 0.0
        %840 = vmatprep.subr.mxu0 0.0
        %841 = vmatpush1.msra.mxu0 0.0
        %842 = vmatprep.subr.mxu0 0.0
        %843 = vmatpush1.msra.mxu0 0.0
        %844 = vmatprep.subr.mxu0 0.0
        %845 = vmatpush1.msra.mxu0 0.0
        %846 = vmatprep.subr.mxu0 0.0
        %847 = vmatpush1.msra.mxu0 0.0
        %848 = vmatprep.subr.mxu0 0.0
        %849 = vmatpush1.msra.mxu0 0.0
        %850 = vmatprep.subr.mxu0 0.0
        %851 = vmatpush1.msra.mxu0 0.0
        %852 = vmatprep.subr.mxu0 0.0
        %853 = vmatpush1.msra.mxu0 0.0
        %854 = vmatprep.subr.mxu0 0.0
        %855 = vmatpush1.msra.mxu0 0.0
        %856 = vmatprep.subr.mxu0 0.0
        %857 = vmatpush1.msra.mxu0 0.0
        %858 = vmatprep.subr.mxu0 0.0
        %859 = vmatpush1.msra.mxu0 0.0
        %860 = vmatprep.subr.mxu0 0.0
        %861 = vmatpush1.msra.mxu0 0.0
        %862 = vmatprep.subr.mxu0 0.0
        %863 = vmatpush1.msra.mxu0 0.0
        %864 = vmatprep.subr.mxu0 0.0
        %865 = vmatpush1.msra.mxu0 0.0
        %866 = vmatprep.subr.mxu0 0.0
        %867 = vmatpush1.msra.mxu0 0.0
        %868 = vmatprep.subr.mxu0 0.0
        %869 = vmatpush1.msra.mxu0 0.0
        %870 = vmatprep.subr.mxu0 0.0
        %871 = vmatpush1.msra.mxu0 0.0
        %872 = vmatprep.subr.mxu0 0.0
        %873 = vmatpush1.msra.mxu0 0.0
        %874 = vmatprep.subr.mxu0 0.0
        %875 = vmatpush1.msra.mxu0 0.0
        %876 = vmatprep.subr.mxu0 0.0
        %877 = vmatpush1.msra.mxu0 0.0
        %878 = vmatprep.subr.mxu0 0.0
        %879 = vmatpush1.msra.mxu0 0.0
        %880 = vmatprep.subr.mxu0 0.0
        %881 = vmatpush1.msra.mxu0 0.0
        %882 = vmatprep.subr.mxu0 0.0
        %883 = vmatpush1.msra.mxu0 0.0
        %884 = vmatprep.subr.mxu0 0.0
        %885 = vmatpush1.msra.mxu0 0.0
        %886 = vmatprep.subr.mxu0 0.0
        %887 = vmatpush1.msra.mxu0 0.0
        %888 = vmatprep.subr.mxu0 0.0
        %889 = vmatpush1.msra.mxu0 0.0
        %890 = vmatprep.subr.mxu0 0.0
        %891 = vmatpush1.msra.mxu0 0.0
        %892 = vmatprep.subr.mxu0 0.0
        %893 = vmatpush1.msra.mxu0 0.0
        %894 = vmatprep.subr.mxu0 0.0
        %895 = vmatpush1.msra.mxu0 0.0
        %896 = vmatprep.mubr.f32.mxu0 0.0
        %v897 = vand.u32 %v826, 4294901760
        %v898 = vsub.f32 %v826, %v897
        %v899 = vand.u32 %v898, 4294901760
        %v900 = vsub.f32 %v898, %v899
        %v901 = vand.u32 %v900, 4294901760
        %902 = vmatmul.mubr.f32.gmra.mrb[0].mxu0 %v901
        %v903 = vpop.f32.mrb[0].mxu0
        %v904 = vadd.f32 0.0, %v903
        %v905 = vpop.f32.mrb[0].mxu0
        %906 = vdwg.mxu0
        %907 = vmatprep.subr.mxu0 0.0
        %v908 = vand.u32 %v829, 4294901760
        %v909 = vsub.f32 %v829, %v908
        %v910 = vand.u32 %v909, 4294901760
        %v911 = vsub.f32 %v909, %v910
        %v912 = vand.u32 %v911, 4294901760
        %913 = vmatpush1.msra.mxu0 %v912
        %914 = vmatprep.subr.mxu0 0.0
        %915 = vmatpush1.msra.mxu0 0.0
        %916 = vmatprep.subr.mxu0 0.0
        %917 = vmatpush1.msra.mxu0 0.0
        %918 = vmatprep.subr.mxu0 0.0
        %919 = vmatpush1.msra.mxu0 0.0
        %920 = vmatprep.subr.mxu0 0.0
        %921 = vmatpush1.msra.mxu0 0.0
        %922 = vmatprep.subr.mxu0 0.0
        %923 = vmatpush1.msra.mxu0 0.0
        %924 = vmatprep.subr.mxu0 0.0
        %925 = vmatpush1.msra.mxu0 0.0
        %926 = vmatprep.subr.mxu0 0.0
        %927 = vmatpush1.msra.mxu0 0.0
        %928 = vmatprep.subr.mxu0 0.0
        %929 = vmatpush1.msra.mxu0 0.0
        %930 = vmatprep.subr.mxu0 0.0
        %931 = vmatpush1.msra.mxu0 0.0
        %932 = vmatprep.subr.mxu0 0.0
        %933 = vmatpush1.msra.mxu0 0.0
        %934 = vmatprep.subr.mxu0 0.0
        %935 = vmatpush1.msra.mxu0 0.0
        %936 = vmatprep.subr.mxu0 0.0
        %937 = vmatpush1.msra.mxu0 0.0
        %938 = vmatprep.subr.mxu0 0.0
        %939 = vmatpush1.msra.mxu0 0.0
        %940 = vmatprep.subr.mxu0 0.0
        %941 = vmatpush1.msra.mxu0 0.0
        %942 = vmatprep.subr.mxu0 0.0
        %943 = vmatpush1.msra.mxu0 0.0
        %944 = vmatprep.subr.mxu0 0.0
        %945 = vmatpush1.msra.mxu0 0.0
        %946 = vmatprep.subr.mxu0 0.0
        %947 = vmatpush1.msra.mxu0 0.0
        %948 = vmatprep.subr.mxu0 0.0
        %949 = vmatpush1.msra.mxu0 0.0
        %950 = vmatprep.subr.mxu0 0.0
        %951 = vmatpush1.msra.mxu0 0.0
        %952 = vmatprep.subr.mxu0 0.0
        %953 = vmatpush1.msra.mxu0 0.0
        %954 = vmatprep.subr.mxu0 0.0
        %955 = vmatpush1.msra.mxu0 0.0
        %956 = vmatprep.subr.mxu0 0.0
        %957 = vmatpush1.msra.mxu0 0.0
        %958 = vmatprep.subr.mxu0 0.0
        %959 = vmatpush1.msra.mxu0 0.0
        %960 = vmatprep.subr.mxu0 0.0
        %961 = vmatpush1.msra.mxu0 0.0
        %962 = vmatprep.subr.mxu0 0.0
        %963 = vmatpush1.msra.mxu0 0.0
        %964 = vmatprep.subr.mxu0 0.0
        %965 = vmatpush1.msra.mxu0 0.0
        %966 = vmatprep.subr.mxu0 0.0
        %967 = vmatpush1.msra.mxu0 0.0
        %968 = vmatprep.subr.mxu0 0.0
        %969 = vmatpush1.msra.mxu0 0.0
        %970 = vmatprep.subr.mxu0 0.0
        %971 = vmatpush1.msra.mxu0 0.0
        %972 = vmatprep.subr.mxu0 0.0
        %973 = vmatpush1.msra.mxu0 0.0
        %974 = vmatprep.subr.mxu0 0.0
        %975 = vmatpush1.msra.mxu0 0.0
        %976 = vmatprep.mubr.f32.mxu0 0.0
        %v977 = vand.u32 %v826, 4294901760
        %978 = vmatmul.mubr.f32.gmra.mrb[0].mxu0 %v977
        %v979 = vpop.f32.mrb[0].mxu0
        %v980 = vadd.f32 %v904, %v979
        %v981 = vpop.f32.mrb[0].mxu0
        %982 = vdwg.mxu0
        %983 = vmatprep.subr.mxu0 0.0
        %v984 = vand.u32 %v829, 4294901760
        %v985 = vsub.f32 %v829, %v984
        %986 = vmatpush1.msra.mxu0 %v985
        %987 = vmatprep.subr.mxu0 0.0
        %988 = vmatpush1.msra.mxu0 0.0
        %989 = vmatprep.subr.mxu0 0.0
        %990 = vmatpush1.msra.mxu0 0.0
        %991 = vmatprep.subr.mxu0 0.0
        %992 = vmatpush1.msra.mxu0 0.0
        %993 = vmatprep.subr.mxu0 0.0
        %994 = vmatpush1.msra.mxu0 0.0
        %995 = vmatprep.subr.mxu0 0.0
        %996 = vmatpush1.msra.mxu0 0.0
        %997 = vmatprep.subr.mxu0 0.0
        %998 = vmatpush1.msra.mxu0 0.0
        %999 = vmatprep.subr.mxu0 0.0
        %1000 = vmatpush1.msra.mxu0 0.0
        %1001 = vmatprep.subr.mxu0 0.0
        %1002 = vmatpush1.msra.mxu0 0.0
        %1003 = vmatprep.subr.mxu0 0.0
        %1004 = vmatpush1.msra.mxu0 0.0
        %1005 = vmatprep.subr.mxu0 0.0
        %1006 = vmatpush1.msra.mxu0 0.0
        %1007 = vmatprep.subr.mxu0 0.0
        %1008 = vmatpush1.msra.mxu0 0.0
        %1009 = vmatprep.subr.mxu0 0.0
        %1010 = vmatpush1.msra.mxu0 0.0
        %1011 = vmatprep.subr.mxu0 0.0
        %1012 = vmatpush1.msra.mxu0 0.0
        %1013 = vmatprep.subr.mxu0 0.0
        %1014 = vmatpush1.msra.mxu0 0.0
        %1015 = vmatprep.subr.mxu0 0.0
        %1016 = vmatpush1.msra.mxu0 0.0
        %1017 = vmatprep.subr.mxu0 0.0
        %1018 = vmatpush1.msra.mxu0 0.0
        %1019 = vmatprep.subr.mxu0 0.0
        %1020 = vmatpush1.msra.mxu0 0.0
        %1021 = vmatprep.subr.mxu0 0.0
        %1022 = vmatpush1.msra.mxu0 0.0
        %1023 = vmatprep.subr.mxu0 0.0
        %1024 = vmatpush1.msra.mxu0 0.0
        %1025 = vmatprep.subr.mxu0 0.0
        %1026 = vmatpush1.msra.mxu0 0.0
        %1027 = vmatprep.subr.mxu0 0.0
        %1028 = vmatpush1.msra.mxu0 0.0
        %1029 = vmatprep.subr.mxu0 0.0
        %1030 = vmatpush1.msra.mxu0 0.0
        %1031 = vmatprep.subr.mxu0 0.0
        %1032 = vmatpush1.msra.mxu0 0.0
        %1033 = vmatprep.subr.mxu0 0.0
        %1034 = vmatpush1.msra.mxu0 0.0
        %1035 = vmatprep.subr.mxu0 0.0
        %1036 = vmatpush1.msra.mxu0 0.0
        %1037 = vmatprep.subr.mxu0 0.0
        %1038 = vmatpush1.msra.mxu0 0.0
        %1039 = vmatprep.subr.mxu0 0.0
        %1040 = vmatpush1.msra.mxu0 0.0
        %1041 = vmatprep.subr.mxu0 0.0
        %1042 = vmatpush1.msra.mxu0 0.0
        %1043 = vmatprep.subr.mxu0 0.0
        %1044 = vmatpush1.msra.mxu0 0.0
        %1045 = vmatprep.subr.mxu0 0.0
        %1046 = vmatpush1.msra.mxu0 0.0
        %1047 = vmatprep.subr.mxu0 0.0
        %1048 = vmatpush1.msra.mxu0 0.0
        %1049 = vmatprep.mubr.f32.mxu0 0.0
        %v1050 = vand.u32 %v826, 4294901760
        %v1051 = vsub.f32 %v826, %v1050
        %1052 = vmatmul.mubr.f32.gmra.mrb[0].mxu0 %v1051
        %v1053 = vpop.f32.mrb[0].mxu0
        %v1054 = vadd.f32 %v980, %v1053
        %v1055 = vpop.f32.mrb[0].mxu0
        %1056 = vdwg.mxu0
        %1057 = vmatprep.subr.mxu0 0.0
        %v1058 = vand.u32 %v829, 4294901760
        %1059 = vmatpush1.msra.mxu0 %v1058
        %1060 = vmatprep.subr.mxu0 0.0
        %1061 = vmatpush1.msra.mxu0 0.0
        %1062 = vmatprep.subr.mxu0 0.0
        %1063 = vmatpush1.msra.mxu0 0.0
        %1064 = vmatprep.subr.mxu0 0.0
        %1065 = vmatpush1.msra.mxu0 0.0
        %1066 = vmatprep.subr.mxu0 0.0
        %1067 = vmatpush1.msra.mxu0 0.0
        %1068 = vmatprep.subr.mxu0 0.0
        %1069 = vmatpush1.msra.mxu0 0.0
        %1070 = vmatprep.subr.mxu0 0.0
        %1071 = vmatpush1.msra.mxu0 0.0
        %1072 = vmatprep.subr.mxu0 0.0
        %1073 = vmatpush1.msra.mxu0 0.0
        %1074 = vmatprep.subr.mxu0 0.0
        %1075 = vmatpush1.msra.mxu0 0.0
        %1076 = vmatprep.subr.mxu0 0.0
        %1077 = vmatpush1.msra.mxu0 0.0
        %1078 = vmatprep.subr.mxu0 0.0
        %1079 = vmatpush1.msra.mxu0 0.0
        %1080 = vmatprep.subr.mxu0 0.0
        %1081 = vmatpush1.msra.mxu0 0.0
        %1082 = vmatprep.subr.mxu0 0.0
        %1083 = vmatpush1.msra.mxu0 0.0
        %1084 = vmatprep.subr.mxu0 0.0
        %1085 = vmatpush1.msra.mxu0 0.0
        %1086 = vmatprep.subr.mxu0 0.0
        %1087 = vmatpush1.msra.mxu0 0.0
        %1088 = vmatprep.subr.mxu0 0.0
        %1089 = vmatpush1.msra.mxu0 0.0
        %1090 = vmatprep.subr.mxu0 0.0
        %1091 = vmatpush1.msra.mxu0 0.0
        %1092 = vmatprep.subr.mxu0 0.0
        %1093 = vmatpush1.msra.mxu0 0.0
        %1094 = vmatprep.subr.mxu0 0.0
        %1095 = vmatpush1.msra.mxu0 0.0
        %1096 = vmatprep.subr.mxu0 0.0
        %1097 = vmatpush1.msra.mxu0 0.0
        %1098 = vmatprep.subr.mxu0 0.0
        %1099 = vmatpush1.msra.mxu0 0.0
        %1100 = vmatprep.subr.mxu0 0.0
        %1101 = vmatpush1.msra.mxu0 0.0
        %1102 = vmatprep.subr.mxu0 0.0
        %1103 = vmatpush1.msra.mxu0 0.0
        %1104 = vmatprep.subr.mxu0 0.0
        %1105 = vmatpush1.msra.mxu0 0.0
        %1106 = vmatprep.subr.mxu0 0.0
        %1107 = vmatpush1.msra.mxu0 0.0
        %1108 = vmatprep.subr.mxu0 0.0
        %1109 = vmatpush1.msra.mxu0 0.0
        %1110 = vmatprep.subr.mxu0 0.0
        %1111 = vmatpush1.msra.mxu0 0.0
        %1112 = vmatprep.subr.mxu0 0.0
        %1113 = vmatpush1.msra.mxu0 0.0
        %1114 = vmatprep.subr.mxu0 0.0
        %1115 = vmatpush1.msra.mxu0 0.0
        %1116 = vmatprep.subr.mxu0 0.0
        %1117 = vmatpush1.msra.mxu0 0.0
        %1118 = vmatprep.subr.mxu0 0.0
        %1119 = vmatpush1.msra.mxu0 0.0
        %1120 = vmatprep.subr.mxu0 0.0
        %1121 = vmatpush1.msra.mxu0 0.0
        %1122 = vmatprep.mubr.f32.mxu0 0.0
        %v1123 = vand.u32 %v826, 4294901760
        %v1124 = vsub.f32 %v826, %v1123
        %v1125 = vand.u32 %v1124, 4294901760
        %1126 = vmatmul.mubr.f32.gmra.mrb[0].mxu0 %v1125
        %v1127 = vpop.f32.mrb[0].mxu0
        %v1128 = vadd.f32 %v1054, %v1127
        %v1129 = vpop.f32.mrb[0].mxu0
        %1130 = vdwg.mxu0
        %1131 = vmatprep.subr.mxu0 0.0
        %v1132 = vand.u32 %v829, 4294901760
        %v1133 = vsub.f32 %v829, %v1132
        %v1134 = vand.u32 %v1133, 4294901760
        %1135 = vmatpush1.msra.mxu0 %v1134
        %1136 = vmatprep.subr.mxu0 0.0
        %1137 = vmatpush1.msra.mxu0 0.0
        %1138 = vmatprep.subr.mxu0 0.0
        %1139 = vmatpush1.msra.mxu0 0.0
        %1140 = vmatprep.subr.mxu0 0.0
        %1141 = vmatpush1.msra.mxu0 0.0
        %1142 = vmatprep.subr.mxu0 0.0
        %1143 = vmatpush1.msra.mxu0 0.0
        %1144 = vmatprep.subr.mxu0 0.0
        %1145 = vmatpush1.msra.mxu0 0.0
        %1146 = vmatprep.subr.mxu0 0.0
        %1147 = vmatpush1.msra.mxu0 0.0
        %1148 = vmatprep.subr.mxu0 0.0
        %1149 = vmatpush1.msra.mxu0 0.0
        %1150 = vmatprep.subr.mxu0 0.0
        %1151 = vmatpush1.msra.mxu0 0.0
        %1152 = vmatprep.subr.mxu0 0.0
        %1153 = vmatpush1.msra.mxu0 0.0
        %1154 = vmatprep.subr.mxu0 0.0
        %1155 = vmatpush1.msra.mxu0 0.0
        %1156 = vmatprep.subr.mxu0 0.0
        %1157 = vmatpush1.msra.mxu0 0.0
        %1158 = vmatprep.subr.mxu0 0.0
        %1159 = vmatpush1.msra.mxu0 0.0
        %1160 = vmatprep.subr.mxu0 0.0
        %1161 = vmatpush1.msra.mxu0 0.0
        %1162 = vmatprep.subr.mxu0 0.0
        %1163 = vmatpush1.msra.mxu0 0.0
        %1164 = vmatprep.subr.mxu0 0.0
        %1165 = vmatpush1.msra.mxu0 0.0
        %1166 = vmatprep.subr.mxu0 0.0
        %1167 = vmatpush1.msra.mxu0 0.0
        %1168 = vmatprep.subr.mxu0 0.0
        %1169 = vmatpush1.msra.mxu0 0.0
        %1170 = vmatprep.subr.mxu0 0.0
        %1171 = vmatpush1.msra.mxu0 0.0
        %1172 = vmatprep.subr.mxu0 0.0
        %1173 = vmatpush1.msra.mxu0 0.0
        %1174 = vmatprep.subr.mxu0 0.0
        %1175 = vmatpush1.msra.mxu0 0.0
        %1176 = vmatprep.subr.mxu0 0.0
        %1177 = vmatpush1.msra.mxu0 0.0
        %1178 = vmatprep.subr.mxu0 0.0
        %1179 = vmatpush1.msra.mxu0 0.0
        %1180 = vmatprep.subr.mxu0 0.0
        %1181 = vmatpush1.msra.mxu0 0.0
        %1182 = vmatprep.subr.mxu0 0.0
        %1183 = vmatpush1.msra.mxu0 0.0
        %1184 = vmatprep.subr.mxu0 0.0
        %1185 = vmatpush1.msra.mxu0 0.0
        %1186 = vmatprep.subr.mxu0 0.0
        %1187 = vmatpush1.msra.mxu0 0.0
        %1188 = vmatprep.subr.mxu0 0.0
        %1189 = vmatpush1.msra.mxu0 0.0
        %1190 = vmatprep.subr.mxu0 0.0
        %1191 = vmatpush1.msra.mxu0 0.0
        %1192 = vmatprep.subr.mxu0 0.0
        %1193 = vmatpush1.msra.mxu0 0.0
        %1194 = vmatprep.subr.mxu0 0.0
        %1195 = vmatpush1.msra.mxu0 0.0
        %1196 = vmatprep.subr.mxu0 0.0
        %1197 = vmatpush1.msra.mxu0 0.0
        %1198 = vmatprep.mubr.f32.mxu0 0.0
        %v1199 = vand.u32 %v826, 4294901760
        %1200 = vmatmul.mubr.f32.gmra.mrb[0].mxu0 %v1199
        %v1201 = vpop.f32.mrb[0].mxu0
        %v1202 = vadd.f32 %v1128, %v1201
        %v1203 = vpop.f32.mrb[0].mxu0
        %1204 = vdwg.mxu0
        %1205 = vmatprep.subr.mxu0 0.0
        %v1206 = vand.u32 %v829, 4294901760
        %1207 = vmatpush1.msra.mxu0 %v1206
        %1208 = vmatprep.subr.mxu0 0.0
        %1209 = vmatpush1.msra.mxu0 0.0
        %1210 = vmatprep.subr.mxu0 0.0
        %1211 = vmatpush1.msra.mxu0 0.0
        %1212 = vmatprep.subr.mxu0 0.0
        %1213 = vmatpush1.msra.mxu0 0.0
        %1214 = vmatprep.subr.mxu0 0.0
        %1215 = vmatpush1.msra.mxu0 0.0
        %1216 = vmatprep.subr.mxu0 0.0
        %1217 = vmatpush1.msra.mxu0 0.0
        %1218 = vmatprep.subr.mxu0 0.0
        %1219 = vmatpush1.msra.mxu0 0.0
        %1220 = vmatprep.subr.mxu0 0.0
        %1221 = vmatpush1.msra.mxu0 0.0
        %1222 = vmatprep.subr.mxu0 0.0
        %1223 = vmatpush1.msra.mxu0 0.0
        %1224 = vmatprep.subr.mxu0 0.0
        %1225 = vmatpush1.msra.mxu0 0.0
        %1226 = vmatprep.subr.mxu0 0.0
        %1227 = vmatpush1.msra.mxu0 0.0
        %1228 = vmatprep.subr.mxu0 0.0
        %1229 = vmatpush1.msra.mxu0 0.0
        %1230 = vmatprep.subr.mxu0 0.0
        %1231 = vmatpush1.msra.mxu0 0.0
        %1232 = vmatprep.subr.mxu0 0.0
        %1233 = vmatpush1.msra.mxu0 0.0
        %1234 = vmatprep.subr.mxu0 0.0
        %1235 = vmatpush1.msra.mxu0 0.0
        %1236 = vmatprep.subr.mxu0 0.0
        %1237 = vmatpush1.msra.mxu0 0.0
        %1238 = vmatprep.subr.mxu0 0.0
        %1239 = vmatpush1.msra.mxu0 0.0
        %1240 = vmatprep.subr.mxu0 0.0
        %1241 = vmatpush1.msra.mxu0 0.0
        %1242 = vmatprep.subr.mxu0 0.0
        %1243 = vmatpush1.msra.mxu0 0.0
        %1244 = vmatprep.subr.mxu0 0.0
        %1245 = vmatpush1.msra.mxu0 0.0
        %1246 = vmatprep.subr.mxu0 0.0
        %1247 = vmatpush1.msra.mxu0 0.0
        %1248 = vmatprep.subr.mxu0 0.0
        %1249 = vmatpush1.msra.mxu0 0.0
        %1250 = vmatprep.subr.mxu0 0.0
        %1251 = vmatpush1.msra.mxu0 0.0
        %1252 = vmatprep.subr.mxu0 0.0
        %1253 = vmatpush1.msra.mxu0 0.0
        %1254 = vmatprep.subr.mxu0 0.0
        %1255 = vmatpush1.msra.mxu0 0.0
        %1256 = vmatprep.subr.mxu0 0.0
        %1257 = vmatpush1.msra.mxu0 0.0
        %1258 = vmatprep.subr.mxu0 0.0
        %1259 = vmatpush1.msra.mxu0 0.0
        %1260 = vmatprep.subr.mxu0 0.0
        %1261 = vmatpush1.msra.mxu0 0.0
        %1262 = vmatprep.subr.mxu0 0.0
        %1263 = vmatpush1.msra.mxu0 0.0
        %1264 = vmatprep.subr.mxu0 0.0
        %1265 = vmatpush1.msra.mxu0 0.0
        %1266 = vmatprep.subr.mxu0 0.0
        %1267 = vmatpush1.msra.mxu0 0.0
        %1268 = vmatprep.subr.mxu0 0.0
        %1269 = vmatpush1.msra.mxu0 0.0
        %1270 = vmatprep.mubr.f32.mxu0 0.0
        %v1271 = vand.u32 %v826, 4294901760
        %1272 = vmatmul.mubr.f32.gmra.mrb[0].mxu0 %v1271
        %v1273 = vpop.f32.mrb[0].mxu0
        %v1274 = vadd.f32 %v1202, %v1273
        %v1275 = vpop.f32.mrb[0].mxu0
        %1276 = vdwg.mxu0
        %v1277 = vadd.f32 %v823, %v1274
        %1278 = vst.msk [vmem:[#allocation3] sm:$0x1] %vm821, %v1277
        %p1279 = scmp.eq.s32.totalorder %s24, 1
        // Predicated region
        $region45: #{tpu_custom_call.1} parent=39 // pred_check
          %p1280 = pneg %p1279
        $region46: #{tpu_custom_call.1} parent=39 // pred_check_branch
          %1282 = sbr.rel (%p1280) target = $region48
        $region47: #{tpu_custom_call.1} parent=39 // pred_region
          %v1283 = vld [vmem:[#allocation2] sm:$0x1]
          %v1284 = vmul.f32 %v1283, 0.001953125
          %v1285 = vld [vmem:[#allocation3] sm:$0x1]
          %v1286 = vmul.f32 %v1285, 0.001953125
          %v1287 = vmul.f32 %v1284, %v1284
          %v1288 = vsub.f32 %v1286, %v1287
          %v1289 = vadd.f32 %v1288, 1e-05
          %v1290 = vrsqrt.pop %v1289
          %v1291 = vld [vmem:[%s4] sm:$0x3]
          %vm1292 = vcmask 15360
          %v1294 = vsel %vm1292, %v1284, 0
          %vm1296 = vcmask 1041408
          %v1298 = vsel %vm1296, %v1291, 0
          %1300 = vmatprep.subr.mxu0 0.0
          %v1301 = vand.u32 %v1298, 4294901760
          %1302 = vmatpush1.msra.mxu0 %v1301
          %1303 = vmatprep.subr.mxu0 0.0
          %1304 = vmatpush1.msra.mxu0 0.0
          %1305 = vmatprep.subr.mxu0 0.0
          %1306 = vmatpush1.msra.mxu0 0.0
          %1307 = vmatprep.subr.mxu0 0.0
          %1308 = vmatpush1.msra.mxu0 0.0
          %1309 = vmatprep.subr.mxu0 0.0
          %1310 = vmatpush1.msra.mxu0 0.0
          %1311 = vmatprep.subr.mxu0 0.0
          %1312 = vmatpush1.msra.mxu0 0.0
          %1313 = vmatprep.subr.mxu0 0.0
          %1314 = vmatpush1.msra.mxu0 0.0
          %1315 = vmatprep.subr.mxu0 0.0
          %1316 = vmatpush1.msra.mxu0 0.0
          %1317 = vmatprep.subr.mxu0 0.0
          %1318 = vmatpush1.msra.mxu0 0.0
          %1319 = vmatprep.subr.mxu0 0.0
          %1320 = vmatpush1.msra.mxu0 0.0
          %1321 = vmatprep.subr.mxu0 0.0
          %1322 = vmatpush1.msra.mxu0 0.0
          %1323 = vmatprep.subr.mxu0 0.0
          %1324 = vmatpush1.msra.mxu0 0.0
          %1325 = vmatprep.subr.mxu0 0.0
          %1326 = vmatpush1.msra.mxu0 0.0
          %1327 = vmatprep.subr.mxu0 0.0
          %1328 = vmatpush1.msra.mxu0 0.0
          %1329 = vmatprep.subr.mxu0 0.0
          %1330 = vmatpush1.msra.mxu0 0.0
          %1331 = vmatprep.subr.mxu0 0.0
          %1332 = vmatpush1.msra.mxu0 0.0
          %1333 = vmatprep.subr.mxu0 0.0
          %1334 = vmatpush1.msra.mxu0 0.0
          %1335 = vmatprep.subr.mxu0 0.0
          %1336 = vmatpush1.msra.mxu0 0.0
          %1337 = vmatprep.subr.mxu0 0.0
          %1338 = vmatpush1.msra.mxu0 0.0
          %1339 = vmatprep.subr.mxu0 0.0
          %1340 = vmatpush1.msra.mxu0 0.0
          %1341 = vmatprep.subr.mxu0 0.0
          %1342 = vmatpush1.msra.mxu0 0.0
          %1343 = vmatprep.subr.mxu0 0.0
          %1344 = vmatpush1.msra.mxu0 0.0
          %1345 = vmatprep.subr.mxu0 0.0
          %1346 = vmatpush1.msra.mxu0 0.0
          %1347 = vmatprep.subr.mxu0 0.0
          %1348 = vmatpush1.msra.mxu0 0.0
          %1349 = vmatprep.subr.mxu0 0.0
          %1350 = vmatpush1.msra.mxu0 0.0
          %1351 = vmatprep.subr.mxu0 0.0
          %1352 = vmatpush1.msra.mxu0 0.0
          %1353 = vmatprep.subr.mxu0 0.0
          %1354 = vmatpush1.msra.mxu0 0.0
          %1355 = vmatprep.subr.mxu0 0.0
          %1356 = vmatpush1.msra.mxu0 0.0
          %1357 = vmatprep.subr.mxu0 0.0
          %1358 = vmatpush1.msra.mxu0 0.0
          %1359 = vmatprep.subr.mxu0 0.0
          %1360 = vmatpush1.msra.mxu0 0.0
          %1361 = vmatprep.subr.mxu0 0.0
          %1362 = vmatpush1.msra.mxu0 0.0
          %1363 = vmatprep.subr.mxu0 0.0
          %1364 = vmatpush1.msra.mxu0 0.0
          %1365 = vmatprep.mubr.f32.mxu0 0.0
          %v1366 = vand.u32 %v1294, 4294901760
          %v1367 = vsub.f32 %v1294, %v1366
          %v1368 = vand.u32 %v1367, 4294901760
          %v1369 = vsub.f32 %v1367, %v1368
          %v1370 = vand.u32 %v1369, 4294901760
          %1371 = vmatmul.mubr.f32.gmra.mrb[0].mxu0 %v1370
          %v1372 = vpop.f32.mrb[0].mxu0
          %v1373 = vadd.f32 0.0, %v1372
          %v1374 = vpop.f32.mrb[0].mxu0
          %1375 = vdwg.mxu0
          %1376 = vmatprep.subr.mxu0 0.0
          %v1377 = vand.u32 %v1298, 4294901760
          %v1378 = vsub.f32 %v1298, %v1377
          %v1379 = vand.u32 %v1378, 4294901760
          %v1380 = vsub.f32 %v1378, %v1379
          %v1381 = vand.u32 %v1380, 4294901760
          %1382 = vmatpush1.msra.mxu0 %v1381
          %1383 = vmatprep.subr.mxu0 0.0
          %1384 = vmatpush1.msra.mxu0 0.0
          %1385 = vmatprep.subr.mxu0 0.0
          %1386 = vmatpush1.msra.mxu0 0.0
          %1387 = vmatprep.subr.mxu0 0.0
          %1388 = vmatpush1.msra.mxu0 0.0
          %1389 = vmatprep.subr.mxu0 0.0
          %1390 = vmatpush1.msra.mxu0 0.0
          %1391 = vmatprep.subr.mxu0 0.0
          %1392 = vmatpush1.msra.mxu0 0.0
          %1393 = vmatprep.subr.mxu0 0.0
          %1394 = vmatpush1.msra.mxu0 0.0
          %1395 = vmatprep.subr.mxu0 0.0
          %1396 = vmatpush1.msra.mxu0 0.0
          %1397 = vmatprep.subr.mxu0 0.0
          %1398 = vmatpush1.msra.mxu0 0.0
          %1399 = vmatprep.subr.mxu0 0.0
          %1400 = vmatpush1.msra.mxu0 0.0
          %1401 = vmatprep.subr.mxu0 0.0
          %1402 = vmatpush1.msra.mxu0 0.0
          %1403 = vmatprep.subr.mxu0 0.0
          %1404 = vmatpush1.msra.mxu0 0.0
          %1405 = vmatprep.subr.mxu0 0.0
          %1406 = vmatpush1.msra.mxu0 0.0
          %1407 = vmatprep.subr.mxu0 0.0
          %1408 = vmatpush1.msra.mxu0 0.0
          %1409 = vmatprep.subr.mxu0 0.0
          %1410 = vmatpush1.msra.mxu0 0.0
          %1411 = vmatprep.subr.mxu0 0.0
          %1412 = vmatpush1.msra.mxu0 0.0
          %1413 = vmatprep.subr.mxu0 0.0
          %1414 = vmatpush1.msra.mxu0 0.0
          %1415 = vmatprep.subr.mxu0 0.0
          %1416 = vmatpush1.msra.mxu0 0.0
          %1417 = vmatprep.subr.mxu0 0.0
          %1418 = vmatpush1.msra.mxu0 0.0
          %1419 = vmatprep.subr.mxu0 0.0
          %1420 = vmatpush1.msra.mxu0 0.0
          %1421 = vmatprep.subr.mxu0 0.0
          %1422 = vmatpush1.msra.mxu0 0.0
          %1423 = vmatprep.subr.mxu0 0.0
          %1424 = vmatpush1.msra.mxu0 0.0
          %1425 = vmatprep.subr.mxu0 0.0
          %1426 = vmatpush1.msra.mxu0 0.0
          %1427 = vmatprep.subr.mxu0 0.0
          %1428 = vmatpush1.msra.mxu0 0.0
          %1429 = vmatprep.subr.mxu0 0.0
          %1430 = vmatpush1.msra.mxu0 0.0
          %1431 = vmatprep.subr.mxu0 0.0
          %1432 = vmatpush1.msra.mxu0 0.0
          %1433 = vmatprep.subr.mxu0 0.0
          %1434 = vmatpush1.msra.mxu0 0.0
          %1435 = vmatprep.subr.mxu0 0.0
          %1436 = vmatpush1.msra.mxu0 0.0
          %1437 = vmatprep.subr.mxu0 0.0
          %1438 = vmatpush1.msra.mxu0 0.0
          %1439 = vmatprep.subr.mxu0 0.0
          %1440 = vmatpush1.msra.mxu0 0.0
          %1441 = vmatprep.subr.mxu0 0.0
          %1442 = vmatpush1.msra.mxu0 0.0
          %1443 = vmatprep.subr.mxu0 0.0
          %1444 = vmatpush1.msra.mxu0 0.0
          %1445 = vmatprep.mubr.f32.mxu0 0.0
          %v1446 = vand.u32 %v1294, 4294901760
          %1447 = vmatmul.mubr.f32.gmra.mrb[0].mxu0 %v1446
          %v1448 = vpop.f32.mrb[0].mxu0
          %v1449 = vadd.f32 %v1373, %v1448
          %v1450 = vpop.f32.mrb[0].mxu0
          %1451 = vdwg.mxu0
          %1452 = vmatprep.subr.mxu0 0.0
          %v1453 = vand.u32 %v1298, 4294901760
          %v1454 = vsub.f32 %v1298, %v1453
          %1455 = vmatpush1.msra.mxu0 %v1454
          %1456 = vmatprep.subr.mxu0 0.0
          %1457 = vmatpush1.msra.mxu0 0.0
          %1458 = vmatprep.subr.mxu0 0.0
          %1459 = vmatpush1.msra.mxu0 0.0
          %1460 = vmatprep.subr.mxu0 0.0
          %1461 = vmatpush1.msra.mxu0 0.0
          %1462 = vmatprep.subr.mxu0 0.0
          %1463 = vmatpush1.msra.mxu0 0.0
          %1464 = vmatprep.subr.mxu0 0.0
          %1465 = vmatpush1.msra.mxu0 0.0
          %1466 = vmatprep.subr.mxu0 0.0
          %1467 = vmatpush1.msra.mxu0 0.0
          %1468 = vmatprep.subr.mxu0 0.0
          %1469 = vmatpush1.msra.mxu0 0.0
          %1470 = vmatprep.subr.mxu0 0.0
          %1471 = vmatpush1.msra.mxu0 0.0
          %1472 = vmatprep.subr.mxu0 0.0
          %1473 = vmatpush1.msra.mxu0 0.0
          %1474 = vmatprep.subr.mxu0 0.0
          %1475 = vmatpush1.msra.mxu0 0.0
          %1476 = vmatprep.subr.mxu0 0.0
          %1477 = vmatpush1.msra.mxu0 0.0
          %1478 = vmatprep.subr.mxu0 0.0
          %1479 = vmatpush1.msra.mxu0 0.0
          %1480 = vmatprep.subr.mxu0 0.0
          %1481 = vmatpush1.msra.mxu0 0.0
          %1482 = vmatprep.subr.mxu0 0.0
          %1483 = vmatpush1.msra.mxu0 0.0
          %1484 = vmatprep.subr.mxu0 0.0
          %1485 = vmatpush1.msra.mxu0 0.0
          %1486 = vmatprep.subr.mxu0 0.0
          %1487 = vmatpush1.msra.mxu0 0.0
          %1488 = vmatprep.subr.mxu0 0.0
          %1489 = vmatpush1.msra.mxu0 0.0
          %1490 = vmatprep.subr.mxu0 0.0
          %1491 = vmatpush1.msra.mxu0 0.0
          %1492 = vmatprep.subr.mxu0 0.0
          %1493 = vmatpush1.msra.mxu0 0.0
          %1494 = vmatprep.subr.mxu0 0.0
          %1495 = vmatpush1.msra.mxu0 0.0
          %1496 = vmatprep.subr.mxu0 0.0
          %1497 = vmatpush1.msra.mxu0 0.0
          %1498 = vmatprep.subr.mxu0 0.0
          %1499 = vmatpush1.msra.mxu0 0.0
          %1500 = vmatprep.subr.mxu0 0.0
          %1501 = vmatpush1.msra.mxu0 0.0
          %1502 = vmatprep.subr.mxu0 0.0
          %1503 = vmatpush1.msra.mxu0 0.0
          %1504 = vmatprep.subr.mxu0 0.0
          %1505 = vmatpush1.msra.mxu0 0.0
          %1506 = vmatprep.subr.mxu0 0.0
          %1507 = vmatpush1.msra.mxu0 0.0
          %1508 = vmatprep.subr.mxu0 0.0
          %1509 = vmatpush1.msra.mxu0 0.0
          %1510 = vmatprep.subr.mxu0 0.0
          %1511 = vmatpush1.msra.mxu0 0.0
          %1512 = vmatprep.subr.mxu0 0.0
          %1513 = vmatpush1.msra.mxu0 0.0
          %1514 = vmatprep.subr.mxu0 0.0
          %1515 = vmatpush1.msra.mxu0 0.0
          %1516 = vmatprep.subr.mxu0 0.0
          %1517 = vmatpush1.msra.mxu0 0.0
          %1518 = vmatprep.mubr.f32.mxu0 0.0
          %v1519 = vand.u32 %v1294, 4294901760
          %v1520 = vsub.f32 %v1294, %v1519
          %1521 = vmatmul.mubr.f32.gmra.mrb[0].mxu0 %v1520
          %v1522 = vpop.f32.mrb[0].mxu0
          %v1523 = vadd.f32 %v1449, %v1522
          %v1524 = vpop.f32.mrb[0].mxu0
          %1525 = vdwg.mxu0
          %1526 = vmatprep.subr.mxu0 0.0
          %v1527 = vand.u32 %v1298, 4294901760
          %1528 = vmatpush1.msra.mxu0 %v1527
          %1529 = vmatprep.subr.mxu0 0.0
          %1530 = vmatpush1.msra.mxu0 0.0
          %1531 = vmatprep.subr.mxu0 0.0
          %1532 = vmatpush1.msra.mxu0 0.0
          %1533 = vmatprep.subr.mxu0 0.0
          %1534 = vmatpush1.msra.mxu0 0.0
          %1535 = vmatprep.subr.mxu0 0.0
          %1536 = vmatpush1.msra.mxu0 0.0
          %1537 = vmatprep.subr.mxu0 0.0
          %1538 = vmatpush1.msra.mxu0 0.0
          %1539 = vmatprep.subr.mxu0 0.0
          %1540 = vmatpush1.msra.mxu0 0.0
          %1541 = vmatprep.subr.mxu0 0.0
          %1542 = vmatpush1.msra.mxu0 0.0
          %1543 = vmatprep.subr.mxu0 0.0
          %1544 = vmatpush1.msra.mxu0 0.0
          %1545 = vmatprep.subr.mxu0 0.0
          %1546 = vmatpush1.msra.mxu0 0.0
          %1547 = vmatprep.subr.mxu0 0.0
          %1548 = vmatpush1.msra.mxu0 0.0
          %1549 = vmatprep.subr.mxu0 0.0
          %1550 = vmatpush1.msra.mxu0 0.0
          %1551 = vmatprep.subr.mxu0 0.0
          %1552 = vmatpush1.msra.mxu0 0.0
          %1553 = vmatprep.subr.mxu0 0.0
          %1554 = vmatpush1.msra.mxu0 0.0
          %1555 = vmatprep.subr.mxu0 0.0
          %1556 = vmatpush1.msra.mxu0 0.0
          %1557 = vmatprep.subr.mxu0 0.0
          %1558 = vmatpush1.msra.mxu0 0.0
          %1559 = vmatprep.subr.mxu0 0.0
          %1560 = vmatpush1.msra.mxu0 0.0
          %1561 = vmatprep.subr.mxu0 0.0
          %1562 = vmatpush1.msra.mxu0 0.0
          %1563 = vmatprep.subr.mxu0 0.0
          %1564 = vmatpush1.msra.mxu0 0.0
          %1565 = vmatprep.subr.mxu0 0.0
          %1566 = vmatpush1.msra.mxu0 0.0
          %1567 = vmatprep.subr.mxu0 0.0
          %1568 = vmatpush1.msra.mxu0 0.0
          %1569 = vmatprep.subr.mxu0 0.0
          %1570 = vmatpush1.msra.mxu0 0.0
          %1571 = vmatprep.subr.mxu0 0.0
          %1572 = vmatpush1.msra.mxu0 0.0
          %1573 = vmatprep.subr.mxu0 0.0
          %1574 = vmatpush1.msra.mxu0 0.0
          %1575 = vmatprep.subr.mxu0 0.0
          %1576 = vmatpush1.msra.mxu0 0.0
          %1577 = vmatprep.subr.mxu0 0.0
          %1578 = vmatpush1.msra.mxu0 0.0
          %1579 = vmatprep.subr.mxu0 0.0
          %1580 = vmatpush1.msra.mxu0 0.0
          %1581 = vmatprep.subr.mxu0 0.0
          %1582 = vmatpush1.msra.mxu0 0.0
          %1583 = vmatprep.subr.mxu0 0.0
          %1584 = vmatpush1.msra.mxu0 0.0
          %1585 = vmatprep.subr.mxu0 0.0
          %1586 = vmatpush1.msra.mxu0 0.0
          %1587 = vmatprep.subr.mxu0 0.0
          %1588 = vmatpush1.msra.mxu0 0.0
          %1589 = vmatprep.subr.mxu0 0.0
          %1590 = vmatpush1.msra.mxu0 0.0
          %1591 = vmatprep.mubr.f32.mxu0 0.0
          %v1592 = vand.u32 %v1294, 4294901760
          %v1593 = vsub.f32 %v1294, %v1592
          %v1594 = vand.u32 %v1593, 4294901760
          %1595 = vmatmul.mubr.f32.gmra.mrb[0].mxu0 %v1594
          %v1596 = vpop.f32.mrb[0].mxu0
          %v1597 = vadd.f32 %v1523, %v1596
          %v1598 = vpop.f32.mrb[0].mxu0
          %1599 = vdwg.mxu0
          %1600 = vmatprep.subr.mxu0 0.0
          %v1601 = vand.u32 %v1298, 4294901760
          %v1602 = vsub.f32 %v1298, %v1601
          %v1603 = vand.u32 %v1602, 4294901760
          %1604 = vmatpush1.msra.mxu0 %v1603
          %1605 = vmatprep.subr.mxu0 0.0
          %1606 = vmatpush1.msra.mxu0 0.0
          %1607 = vmatprep.subr.mxu0 0.0
          %1608 = vmatpush1.msra.mxu0 0.0
          %1609 = vmatprep.subr.mxu0 0.0
          %1610 = vmatpush1.msra.mxu0 0.0
          %1611 = vmatprep.subr.mxu0 0.0
          %1612 = vmatpush1.msra.mxu0 0.0
          %1613 = vmatprep.subr.mxu0 0.0
          %1614 = vmatpush1.msra.mxu0 0.0
          %1615 = vmatprep.subr.mxu0 0.0
          %1616 = vmatpush1.msra.mxu0 0.0
          %1617 = vmatprep.subr.mxu0 0.0
          %1618 = vmatpush1.msra.mxu0 0.0
          %1619 = vmatprep.subr.mxu0 0.0
          %1620 = vmatpush1.msra.mxu0 0.0
          %1621 = vmatprep.subr.mxu0 0.0
          %1622 = vmatpush1.msra.mxu0 0.0
          %1623 = vmatprep.subr.mxu0 0.0
          %1624 = vmatpush1.msra.mxu0 0.0
          %1625 = vmatprep.subr.mxu0 0.0
          %1626 = vmatpush1.msra.mxu0 0.0
          %1627 = vmatprep.subr.mxu0 0.0
          %1628 = vmatpush1.msra.mxu0 0.0
          %1629 = vmatprep.subr.mxu0 0.0
          %1630 = vmatpush1.msra.mxu0 0.0
          %1631 = vmatprep.subr.mxu0 0.0
          %1632 = vmatpush1.msra.mxu0 0.0
          %1633 = vmatprep.subr.mxu0 0.0
          %1634 = vmatpush1.msra.mxu0 0.0
          %1635 = vmatprep.subr.mxu0 0.0
          %1636 = vmatpush1.msra.mxu0 0.0
          %1637 = vmatprep.subr.mxu0 0.0
          %1638 = vmatpush1.msra.mxu0 0.0
          %1639 = vmatprep.subr.mxu0 0.0
          %1640 = vmatpush1.msra.mxu0 0.0
          %1641 = vmatprep.subr.mxu0 0.0
          %1642 = vmatpush1.msra.mxu0 0.0
          %1643 = vmatprep.subr.mxu0 0.0
          %1644 = vmatpush1.msra.mxu0 0.0
          %1645 = vmatprep.subr.mxu0 0.0
          %1646 = vmatpush1.msra.mxu0 0.0
          %1647 = vmatprep.subr.mxu0 0.0
          %1648 = vmatpush1.msra.mxu0 0.0
          %1649 = vmatprep.subr.mxu0 0.0
          %1650 = vmatpush1.msra.mxu0 0.0
          %1651 = vmatprep.subr.mxu0 0.0
          %1652 = vmatpush1.msra.mxu0 0.0
          %1653 = vmatprep.subr.mxu0 0.0
          %1654 = vmatpush1.msra.mxu0 0.0
          %1655 = vmatprep.subr.mxu0 0.0
          %1656 = vmatpush1.msra.mxu0 0.0
          %1657 = vmatprep.subr.mxu0 0.0
          %1658 = vmatpush1.msra.mxu0 0.0
          %1659 = vmatprep.subr.mxu0 0.0
          %1660 = vmatpush1.msra.mxu0 0.0
          %1661 = vmatprep.subr.mxu0 0.0
          %1662 = vmatpush1.msra.mxu0 0.0
          %1663 = vmatprep.subr.mxu0 0.0
          %1664 = vmatpush1.msra.mxu0 0.0
          %1665 = vmatprep.subr.mxu0 0.0
          %1666 = vmatpush1.msra.mxu0 0.0
          %1667 = vmatprep.mubr.f32.mxu0 0.0
          %v1668 = vand.u32 %v1294, 4294901760
          %1669 = vmatmul.mubr.f32.gmra.mrb[0].mxu0 %v1668
          %v1670 = vpop.f32.mrb[0].mxu0
          %v1671 = vadd.f32 %v1597, %v1670
          %v1672 = vpop.f32.mrb[0].mxu0
          %1673 = vdwg.mxu0
          %1674 = vmatprep.subr.mxu0 0.0
          %v1675 = vand.u32 %v1298, 4294901760
          %1676 = vmatpush1.msra.mxu0 %v1675
          %1677 = vmatprep.subr.mxu0 0.0
          %1678 = vmatpush1.msra.mxu0 0.0
          %1679 = vmatprep.subr.mxu0 0.0
          %1680 = vmatpush1.msra.mxu0 0.0
          %1681 = vmatprep.subr.mxu0 0.0
          %1682 = vmatpush1.msra.mxu0 0.0
          %1683 = vmatprep.subr.mxu0 0.0
          %1684 = vmatpush1.msra.mxu0 0.0
          %1685 = vmatprep.subr.mxu0 0.0
          %1686 = vmatpush1.msra.mxu0 0.0
          %1687 = vmatprep.subr.mxu0 0.0
          %1688 = vmatpush1.msra.mxu0 0.0
          %1689 = vmatprep.subr.mxu0 0.0
          %1690 = vmatpush1.msra.mxu0 0.0
          %1691 = vmatprep.subr.mxu0 0.0
          %1692 = vmatpush1.msra.mxu0 0.0
          %1693 = vmatprep.subr.mxu0 0.0
          %1694 = vmatpush1.msra.mxu0 0.0
          %1695 = vmatprep.subr.mxu0 0.0
          %1696 = vmatpush1.msra.mxu0 0.0
          %1697 = vmatprep.subr.mxu0 0.0
          %1698 = vmatpush1.msra.mxu0 0.0
          %1699 = vmatprep.subr.mxu0 0.0
          %1700 = vmatpush1.msra.mxu0 0.0
          %1701 = vmatprep.subr.mxu0 0.0
          %1702 = vmatpush1.msra.mxu0 0.0
          %1703 = vmatprep.subr.mxu0 0.0
          %1704 = vmatpush1.msra.mxu0 0.0
          %1705 = vmatprep.subr.mxu0 0.0
          %1706 = vmatpush1.msra.mxu0 0.0
          %1707 = vmatprep.subr.mxu0 0.0
          %1708 = vmatpush1.msra.mxu0 0.0
          %1709 = vmatprep.subr.mxu0 0.0
          %1710 = vmatpush1.msra.mxu0 0.0
          %1711 = vmatprep.subr.mxu0 0.0
          %1712 = vmatpush1.msra.mxu0 0.0
          %1713 = vmatprep.subr.mxu0 0.0
          %1714 = vmatpush1.msra.mxu0 0.0
          %1715 = vmatprep.subr.mxu0 0.0
          %1716 = vmatpush1.msra.mxu0 0.0
          %1717 = vmatprep.subr.mxu0 0.0
          %1718 = vmatpush1.msra.mxu0 0.0
          %1719 = vmatprep.subr.mxu0 0.0
          %1720 = vmatpush1.msra.mxu0 0.0
          %1721 = vmatprep.subr.mxu0 0.0
          %1722 = vmatpush1.msra.mxu0 0.0
          %1723 = vmatprep.subr.mxu0 0.0
          %1724 = vmatpush1.msra.mxu0 0.0
          %1725 = vmatprep.subr.mxu0 0.0
          %1726 = vmatpush1.msra.mxu0 0.0
          %1727 = vmatprep.subr.mxu0 0.0
          %1728 = vmatpush1.msra.mxu0 0.0
          %1729 = vmatprep.subr.mxu0 0.0
          %1730 = vmatpush1.msra.mxu0 0.0
          %1731 = vmatprep.subr.mxu0 0.0
          %1732 = vmatpush1.msra.mxu0 0.0
          %1733 = vmatprep.subr.mxu0 0.0
          %1734 = vmatpush1.msra.mxu0 0.0
          %1735 = vmatprep.subr.mxu0 0.0
          %1736 = vmatpush1.msra.mxu0 0.0
          %1737 = vmatprep.subr.mxu0 0.0
          %1738 = vmatpush1.msra.mxu0 0.0
          %1739 = vmatprep.mubr.f32.mxu0 0.0
          %v1740 = vand.u32 %v1294, 4294901760
          %1741 = vmatmul.mubr.f32.gmra.mrb[0].mxu0 %v1740
          %v1742 = vpop.f32.mrb[0].mxu0
          %v1743 = vadd.f32 %v1671, %v1742
          %v1744 = vpop.f32.mrb[0].mxu0
          %1745 = vdwg.mxu0
          %v1747 = vsel %vm1292, %v1290, 0
          %1749 = vmatprep.subr.mxu0 0.0
          %v1750 = vand.u32 %v1298, 4294901760
          %1751 = vmatpush1.msra.mxu0 %v1750
          %1752 = vmatprep.subr.mxu0 0.0
          %1753 = vmatpush1.msra.mxu0 0.0
          %1754 = vmatprep.subr.mxu0 0.0
          %1755 = vmatpush1.msra.mxu0 0.0
          %1756 = vmatprep.subr.mxu0 0.0
          %1757 = vmatpush1.msra.mxu0 0.0
          %1758 = vmatprep.subr.mxu0 0.0
          %1759 = vmatpush1.msra.mxu0 0.0
          %1760 = vmatprep.subr.mxu0 0.0
          %1761 = vmatpush1.msra.mxu0 0.0
          %1762 = vmatprep.subr.mxu0 0.0
          %1763 = vmatpush1.msra.mxu0 0.0
          %1764 = vmatprep.subr.mxu0 0.0
          %1765 = vmatpush1.msra.mxu0 0.0
          %1766 = vmatprep.subr.mxu0 0.0
          %1767 = vmatpush1.msra.mxu0 0.0
          %1768 = vmatprep.subr.mxu0 0.0
          %1769 = vmatpush1.msra.mxu0 0.0
          %1770 = vmatprep.subr.mxu0 0.0
          %1771 = vmatpush1.msra.mxu0 0.0
          %1772 = vmatprep.subr.mxu0 0.0
          %1773 = vmatpush1.msra.mxu0 0.0
          %1774 = vmatprep.subr.mxu0 0.0
          %1775 = vmatpush1.msra.mxu0 0.0
          %1776 = vmatprep.subr.mxu0 0.0
          %1777 = vmatpush1.msra.mxu0 0.0
          %1778 = vmatprep.subr.mxu0 0.0
          %1779 = vmatpush1.msra.mxu0 0.0
          %1780 = vmatprep.subr.mxu0 0.0
          %1781 = vmatpush1.msra.mxu0 0.0
          %1782 = vmatprep.subr.mxu0 0.0
          %1783 = vmatpush1.msra.mxu0 0.0
          %1784 = vmatprep.subr.mxu0 0.0
          %1785 = vmatpush1.msra.mxu0 0.0
          %1786 = vmatprep.subr.mxu0 0.0
          %1787 = vmatpush1.msra.mxu0 0.0
          %1788 = vmatprep.subr.mxu0 0.0
          %1789 = vmatpush1.msra.mxu0 0.0
          %1790 = vmatprep.subr.mxu0 0.0
          %1791 = vmatpush1.msra.mxu0 0.0
          %1792 = vmatprep.subr.mxu0 0.0
          %1793 = vmatpush1.msra.mxu0 0.0
          %1794 = vmatprep.subr.mxu0 0.0
          %1795 = vmatpush1.msra.mxu0 0.0
          %1796 = vmatprep.subr.mxu0 0.0
          %1797 = vmatpush1.msra.mxu0 0.0
          %1798 = vmatprep.subr.mxu0 0.0
          %1799 = vmatpush1.msra.mxu0 0.0
          %1800 = vmatprep.subr.mxu0 0.0
          %1801 = vmatpush1.msra.mxu0 0.0
          %1802 = vmatprep.subr.mxu0 0.0
          %1803 = vmatpush1.msra.mxu0 0.0
          %1804 = vmatprep.subr.mxu0 0.0
          %1805 = vmatpush1.msra.mxu0 0.0
          %1806 = vmatprep.subr.mxu0 0.0
          %1807 = vmatpush1.msra.mxu0 0.0
          %1808 = vmatprep.subr.mxu0 0.0
          %1809 = vmatpush1.msra.mxu0 0.0
          %1810 = vmatprep.subr.mxu0 0.0
          %1811 = vmatpush1.msra.mxu0 0.0
          %1812 = vmatprep.subr.mxu0 0.0
          %1813 = vmatpush1.msra.mxu0 0.0
          %1814 = vmatprep.mubr.f32.mxu0 0.0
          %v1815 = vand.u32 %v1747, 4294901760
          %v1816 = vsub.f32 %v1747, %v1815
          %v1817 = vand.u32 %v1816, 4294901760
          %v1818 = vsub.f32 %v1816, %v1817
          %v1819 = vand.u32 %v1818, 4294901760
          %1820 = vmatmul.mubr.f32.gmra.mrb[0].mxu0 %v1819
          %v1821 = vpop.f32.mrb[0].mxu0
          %v1822 = vadd.f32 0.0, %v1821
          %v1823 = vpop.f32.mrb[0].mxu0
          %1824 = vdwg.mxu0
          %1825 = vmatprep.subr.mxu0 0.0
          %v1826 = vand.u32 %v1298, 4294901760
          %v1827 = vsub.f32 %v1298, %v1826
          %v1828 = vand.u32 %v1827, 4294901760
          %v1829 = vsub.f32 %v1827, %v1828
          %v1830 = vand.u32 %v1829, 4294901760
          %1831 = vmatpush1.msra.mxu0 %v1830
          %1832 = vmatprep.subr.mxu0 0.0
          %1833 = vmatpush1.msra.mxu0 0.0
          %1834 = vmatprep.subr.mxu0 0.0
          %1835 = vmatpush1.msra.mxu0 0.0
          %1836 = vmatprep.subr.mxu0 0.0
          %1837 = vmatpush1.msra.mxu0 0.0
          %1838 = vmatprep.subr.mxu0 0.0
          %1839 = vmatpush1.msra.mxu0 0.0
          %1840 = vmatprep.subr.mxu0 0.0
          %1841 = vmatpush1.msra.mxu0 0.0
          %1842 = vmatprep.subr.mxu0 0.0
          %1843 = vmatpush1.msra.mxu0 0.0
          %1844 = vmatprep.subr.mxu0 0.0
          %1845 = vmatpush1.msra.mxu0 0.0
          %1846 = vmatprep.subr.mxu0 0.0
          %1847 = vmatpush1.msra.mxu0 0.0
          %1848 = vmatprep.subr.mxu0 0.0
          %1849 = vmatpush1.msra.mxu0 0.0
          %1850 = vmatprep.subr.mxu0 0.0
          %1851 = vmatpush1.msra.mxu0 0.0
          %1852 = vmatprep.subr.mxu0 0.0
          %1853 = vmatpush1.msra.mxu0 0.0
          %1854 = vmatprep.subr.mxu0 0.0
          %1855 = vmatpush1.msra.mxu0 0.0
          %1856 = vmatprep.subr.mxu0 0.0
          %1857 = vmatpush1.msra.mxu0 0.0
          %1858 = vmatprep.subr.mxu0 0.0
          %1859 = vmatpush1.msra.mxu0 0.0
          %1860 = vmatprep.subr.mxu0 0.0
          %1861 = vmatpush1.msra.mxu0 0.0
          %1862 = vmatprep.subr.mxu0 0.0
          %1863 = vmatpush1.msra.mxu0 0.0
          %1864 = vmatprep.subr.mxu0 0.0
          %1865 = vmatpush1.msra.mxu0 0.0
          %1866 = vmatprep.subr.mxu0 0.0
          %1867 = vmatpush1.msra.mxu0 0.0
          %1868 = vmatprep.subr.mxu0 0.0
          %1869 = vmatpush1.msra.mxu0 0.0
          %1870 = vmatprep.subr.mxu0 0.0
          %1871 = vmatpush1.msra.mxu0 0.0
          %1872 = vmatprep.subr.mxu0 0.0
          %1873 = vmatpush1.msra.mxu0 0.0
          %1874 = vmatprep.subr.mxu0 0.0
          %1875 = vmatpush1.msra.mxu0 0.0
          %1876 = vmatprep.subr.mxu0 0.0
          %1877 = vmatpush1.msra.mxu0 0.0
          %1878 = vmatprep.subr.mxu0 0.0
          %1879 = vmatpush1.msra.mxu0 0.0
          %1880 = vmatprep.subr.mxu0 0.0
          %1881 = vmatpush1.msra.mxu0 0.0
          %1882 = vmatprep.subr.mxu0 0.0
          %1883 = vmatpush1.msra.mxu0 0.0
          %1884 = vmatprep.subr.mxu0 0.0
          %1885 = vmatpush1.msra.mxu0 0.0
          %1886 = vmatprep.subr.mxu0 0.0
          %1887 = vmatpush1.msra.mxu0 0.0
          %1888 = vmatprep.subr.mxu0 0.0
          %1889 = vmatpush1.msra.mxu0 0.0
          %1890 = vmatprep.subr.mxu0 0.0
          %1891 = vmatpush1.msra.mxu0 0.0
          %1892 = vmatprep.subr.mxu0 0.0
          %1893 = vmatpush1.msra.mxu0 0.0
          %1894 = vmatprep.mubr.f32.mxu0 0.0
          %v1895 = vand.u32 %v1747, 4294901760
          %1896 = vmatmul.mubr.f32.gmra.mrb[0].mxu0 %v1895
          %v1897 = vpop.f32.mrb[0].mxu0
          %v1898 = vadd.f32 %v1822, %v1897
          %v1899 = vpop.f32.mrb[0].mxu0
          %1900 = vdwg.mxu0
          %1901 = vmatprep.subr.mxu0 0.0
          %v1902 = vand.u32 %v1298, 4294901760
          %v1903 = vsub.f32 %v1298, %v1902
          %1904 = vmatpush1.msra.mxu0 %v1903
          %1905 = vmatprep.subr.mxu0 0.0
          %1906 = vmatpush1.msra.mxu0 0.0
          %1907 = vmatprep.subr.mxu0 0.0
          %1908 = vmatpush1.msra.mxu0 0.0
          %1909 = vmatprep.subr.mxu0 0.0
          %1910 = vmatpush1.msra.mxu0 0.0
          %1911 = vmatprep.subr.mxu0 0.0
          %1912 = vmatpush1.msra.mxu0 0.0
          %1913 = vmatprep.subr.mxu0 0.0
          %1914 = vmatpush1.msra.mxu0 0.0
          %1915 = vmatprep.subr.mxu0 0.0
          %1916 = vmatpush1.msra.mxu0 0.0
          %1917 = vmatprep.subr.mxu0 0.0
          %1918 = vmatpush1.msra.mxu0 0.0
          %1919 = vmatprep.subr.mxu0 0.0
          %1920 = vmatpush1.msra.mxu0 0.0
          %1921 = vmatprep.subr.mxu0 0.0
          %1922 = vmatpush1.msra.mxu0 0.0
          %1923 = vmatprep.subr.mxu0 0.0
          %1924 = vmatpush1.msra.mxu0 0.0
          %1925 = vmatprep.subr.mxu0 0.0
          %1926 = vmatpush1.msra.mxu0 0.0
          %1927 = vmatprep.subr.mxu0 0.0
          %1928 = vmatpush1.msra.mxu0 0.0
          %1929 = vmatprep.subr.mxu0 0.0
          %1930 = vmatpush1.msra.mxu0 0.0
          %1931 = vmatprep.subr.mxu0 0.0
          %1932 = vmatpush1.msra.mxu0 0.0
          %1933 = vmatprep.subr.mxu0 0.0
          %1934 = vmatpush1.msra.mxu0 0.0
          %1935 = vmatprep.subr.mxu0 0.0
          %1936 = vmatpush1.msra.mxu0 0.0
          %1937 = vmatprep.subr.mxu0 0.0
          %1938 = vmatpush1.msra.mxu0 0.0
          %1939 = vmatprep.subr.mxu0 0.0
          %1940 = vmatpush1.msra.mxu0 0.0
          %1941 = vmatprep.subr.mxu0 0.0
          %1942 = vmatpush1.msra.mxu0 0.0
          %1943 = vmatprep.subr.mxu0 0.0
          %1944 = vmatpush1.msra.mxu0 0.0
          %1945 = vmatprep.subr.mxu0 0.0
          %1946 = vmatpush1.msra.mxu0 0.0
          %1947 = vmatprep.subr.mxu0 0.0
          %1948 = vmatpush1.msra.mxu0 0.0
          %1949 = vmatprep.subr.mxu0 0.0
          %1950 = vmatpush1.msra.mxu0 0.0
          %1951 = vmatprep.subr.mxu0 0.0
          %1952 = vmatpush1.msra.mxu0 0.0
          %1953 = vmatprep.subr.mxu0 0.0
          %1954 = vmatpush1.msra.mxu0 0.0
          %1955 = vmatprep.subr.mxu0 0.0
          %1956 = vmatpush1.msra.mxu0 0.0
          %1957 = vmatprep.subr.mxu0 0.0
          %1958 = vmatpush1.msra.mxu0 0.0
          %1959 = vmatprep.subr.mxu0 0.0
          %1960 = vmatpush1.msra.mxu0 0.0
          %1961 = vmatprep.subr.mxu0 0.0
          %1962 = vmatpush1.msra.mxu0 0.0
          %1963 = vmatprep.subr.mxu0 0.0
          %1964 = vmatpush1.msra.mxu0 0.0
          %1965 = vmatprep.subr.mxu0 0.0
          %1966 = vmatpush1.msra.mxu0 0.0
          %1967 = vmatprep.mubr.f32.mxu0 0.0
          %v1968 = vand.u32 %v1747, 4294901760
          %v1969 = vsub.f32 %v1747, %v1968
          %1970 = vmatmul.mubr.f32.gmra.mrb[0].mxu0 %v1969
          %v1971 = vpop.f32.mrb[0].mxu0
          %v1972 = vadd.f32 %v1898, %v1971
          %v1973 = vpop.f32.mrb[0].mxu0
          %1974 = vdwg.mxu0
          %1975 = vmatprep.subr.mxu0 0.0
          %v1976 = vand.u32 %v1298, 4294901760
          %1977 = vmatpush1.msra.mxu0 %v1976
          %1978 = vmatprep.subr.mxu0 0.0
          %1979 = vmatpush1.msra.mxu0 0.0
          %1980 = vmatprep.subr.mxu0 0.0
          %1981 = vmatpush1.msra.mxu0 0.0
          %1982 = vmatprep.subr.mxu0 0.0
          %1983 = vmatpush1.msra.mxu0 0.0
          %1984 = vmatprep.subr.mxu0 0.0
          %1985 = vmatpush1.msra.mxu0 0.0
          %1986 = vmatprep.subr.mxu0 0.0
          %1987 = vmatpush1.msra.mxu0 0.0
          %1988 = vmatprep.subr.mxu0 0.0
          %1989 = vmatpush1.msra.mxu0 0.0
          %1990 = vmatprep.subr.mxu0 0.0
          %1991 = vmatpush1.msra.mxu0 0.0
          %1992 = vmatprep.subr.mxu0 0.0
          %1993 = vmatpush1.msra.mxu0 0.0
          %1994 = vmatprep.subr.mxu0 0.0
          %1995 = vmatpush1.msra.mxu0 0.0
          %1996 = vmatprep.subr.mxu0 0.0
          %1997 = vmatpush1.msra.mxu0 0.0
          %1998 = vmatprep.subr.mxu0 0.0
          %1999 = vmatpush1.msra.mxu0 0.0
          %2000 = vmatprep.subr.mxu0 0.0
          %2001 = vmatpush1.msra.mxu0 0.0
          %2002 = vmatprep.subr.mxu0 0.0
          %2003 = vmatpush1.msra.mxu0 0.0
          %2004 = vmatprep.subr.mxu0 0.0
          %2005 = vmatpush1.msra.mxu0 0.0
          %2006 = vmatprep.subr.mxu0 0.0
          %2007 = vmatpush1.msra.mxu0 0.0
          %2008 = vmatprep.subr.mxu0 0.0
          %2009 = vmatpush1.msra.mxu0 0.0
          %2010 = vmatprep.subr.mxu0 0.0
          %2011 = vmatpush1.msra.mxu0 0.0
          %2012 = vmatprep.subr.mxu0 0.0
          %2013 = vmatpush1.msra.mxu0 0.0
          %2014 = vmatprep.subr.mxu0 0.0
          %2015 = vmatpush1.msra.mxu0 0.0
          %2016 = vmatprep.subr.mxu0 0.0
          %2017 = vmatpush1.msra.mxu0 0.0
          %2018 = vmatprep.subr.mxu0 0.0
          %2019 = vmatpush1.msra.mxu0 0.0
          %2020 = vmatprep.subr.mxu0 0.0
          %2021 = vmatpush1.msra.mxu0 0.0
          %2022 = vmatprep.subr.mxu0 0.0
          %2023 = vmatpush1.msra.mxu0 0.0
          %2024 = vmatprep.subr.mxu0 0.0
          %2025 = vmatpush1.msra.mxu0 0.0
          %2026 = vmatprep.subr.mxu0 0.0
          %2027 = vmatpush1.msra.mxu0 0.0
          %2028 = vmatprep.subr.mxu0 0.0
          %2029 = vmatpush1.msra.mxu0 0.0
          %2030 = vmatprep.subr.mxu0 0.0
          %2031 = vmatpush1.msra.mxu0 0.0
          %2032 = vmatprep.subr.mxu0 0.0
          %2033 = vmatpush1.msra.mxu0 0.0
          %2034 = vmatprep.subr.mxu0 0.0
          %2035 = vmatpush1.msra.mxu0 0.0
          %2036 = vmatprep.subr.mxu0 0.0
          %2037 = vmatpush1.msra.mxu0 0.0
          %2038 = vmatprep.subr.mxu0 0.0
          %2039 = vmatpush1.msra.mxu0 0.0
          %2040 = vmatprep.mubr.f32.mxu0 0.0
          %v2041 = vand.u32 %v1747, 4294901760
          %v2042 = vsub.f32 %v1747, %v2041
          %v2043 = vand.u32 %v2042, 4294901760
          %2044 = vmatmul.mubr.f32.gmra.mrb[0].mxu0 %v2043
          %v2045 = vpop.f32.mrb[0].mxu0
          %v2046 = vadd.f32 %v1972, %v2045
          %v2047 = vpop.f32.mrb[0].mxu0
          %2048 = vdwg.mxu0
          %2049 = vmatprep.subr.mxu0 0.0
          %v2050 = vand.u32 %v1298, 4294901760
          %v2051 = vsub.f32 %v1298, %v2050
          %v2052 = vand.u32 %v2051, 4294901760
          %2053 = vmatpush1.msra.mxu0 %v2052
          %2054 = vmatprep.subr.mxu0 0.0
          %2055 = vmatpush1.msra.mxu0 0.0
          %2056 = vmatprep.subr.mxu0 0.0
          %2057 = vmatpush1.msra.mxu0 0.0
          %2058 = vmatprep.subr.mxu0 0.0
          %2059 = vmatpush1.msra.mxu0 0.0
          %2060 = vmatprep.subr.mxu0 0.0
          %2061 = vmatpush1.msra.mxu0 0.0
          %2062 = vmatprep.subr.mxu0 0.0
          %2063 = vmatpush1.msra.mxu0 0.0
          %2064 = vmatprep.subr.mxu0 0.0
          %2065 = vmatpush1.msra.mxu0 0.0
          %2066 = vmatprep.subr.mxu0 0.0
          %2067 = vmatpush1.msra.mxu0 0.0
          %2068 = vmatprep.subr.mxu0 0.0
          %2069 = vmatpush1.msra.mxu0 0.0
          %2070 = vmatprep.subr.mxu0 0.0
          %2071 = vmatpush1.msra.mxu0 0.0
          %2072 = vmatprep.subr.mxu0 0.0
          %2073 = vmatpush1.msra.mxu0 0.0
          %2074 = vmatprep.subr.mxu0 0.0
          %2075 = vmatpush1.msra.mxu0 0.0
          %2076 = vmatprep.subr.mxu0 0.0
          %2077 = vmatpush1.msra.mxu0 0.0
          %2078 = vmatprep.subr.mxu0 0.0
          %2079 = vmatpush1.msra.mxu0 0.0
          %2080 = vmatprep.subr.mxu0 0.0
          %2081 = vmatpush1.msra.mxu0 0.0
          %2082 = vmatprep.subr.mxu0 0.0
          %2083 = vmatpush1.msra.mxu0 0.0
          %2084 = vmatprep.subr.mxu0 0.0
          %2085 = vmatpush1.msra.mxu0 0.0
          %2086 = vmatprep.subr.mxu0 0.0
          %2087 = vmatpush1.msra.mxu0 0.0
          %2088 = vmatprep.subr.mxu0 0.0
          %2089 = vmatpush1.msra.mxu0 0.0
          %2090 = vmatprep.subr.mxu0 0.0
          %2091 = vmatpush1.msra.mxu0 0.0
          %2092 = vmatprep.subr.mxu0 0.0
          %2093 = vmatpush1.msra.mxu0 0.0
          %2094 = vmatprep.subr.mxu0 0.0
          %2095 = vmatpush1.msra.mxu0 0.0
          %2096 = vmatprep.subr.mxu0 0.0
          %2097 = vmatpush1.msra.mxu0 0.0
          %2098 = vmatprep.subr.mxu0 0.0
          %2099 = vmatpush1.msra.mxu0 0.0
          %2100 = vmatprep.subr.mxu0 0.0
          %2101 = vmatpush1.msra.mxu0 0.0
          %2102 = vmatprep.subr.mxu0 0.0
          %2103 = vmatpush1.msra.mxu0 0.0
          %2104 = vmatprep.subr.mxu0 0.0
          %2105 = vmatpush1.msra.mxu0 0.0
          %2106 = vmatprep.subr.mxu0 0.0
          %2107 = vmatpush1.msra.mxu0 0.0
          %2108 = vmatprep.subr.mxu0 0.0
          %2109 = vmatpush1.msra.mxu0 0.0
          %2110 = vmatprep.subr.mxu0 0.0
          %2111 = vmatpush1.msra.mxu0 0.0
          %2112 = vmatprep.subr.mxu0 0.0
          %2113 = vmatpush1.msra.mxu0 0.0
          %2114 = vmatprep.subr.mxu0 0.0
          %2115 = vmatpush1.msra.mxu0 0.0
          %2116 = vmatprep.mubr.f32.mxu0 0.0
          %v2117 = vand.u32 %v1747, 4294901760
          %2118 = vmatmul.mubr.f32.gmra.mrb[0].mxu0 %v2117
          %v2119 = vpop.f32.mrb[0].mxu0
          %v2120 = vadd.f32 %v2046, %v2119
          %v2121 = vpop.f32.mrb[0].mxu0
          %2122 = vdwg.mxu0
          %2123 = vmatprep.subr.mxu0 0.0
          %v2124 = vand.u32 %v1298, 4294901760
          %2125 = vmatpush1.msra.mxu0 %v2124
          %2126 = vmatprep.subr.mxu0 0.0
          %2127 = vmatpush1.msra.mxu0 0.0
          %2128 = vmatprep.subr.mxu0 0.0
          %2129 = vmatpush1.msra.mxu0 0.0
          %2130 = vmatprep.subr.mxu0 0.0
          %2131 = vmatpush1.msra.mxu0 0.0
          %2132 = vmatprep.subr.mxu0 0.0
          %2133 = vmatpush1.msra.mxu0 0.0
          %2134 = vmatprep.subr.mxu0 0.0
          %2135 = vmatpush1.msra.mxu0 0.0
          %2136 = vmatprep.subr.mxu0 0.0
          %2137 = vmatpush1.msra.mxu0 0.0
          %2138 = vmatprep.subr.mxu0 0.0
          %2139 = vmatpush1.msra.mxu0 0.0
          %2140 = vmatprep.subr.mxu0 0.0
          %2141 = vmatpush1.msra.mxu0 0.0
          %2142 = vmatprep.subr.mxu0 0.0
          %2143 = vmatpush1.msra.mxu0 0.0
          %2144 = vmatprep.subr.mxu0 0.0
          %2145 = vmatpush1.msra.mxu0 0.0
          %2146 = vmatprep.subr.mxu0 0.0
          %2147 = vmatpush1.msra.mxu0 0.0
          %2148 = vmatprep.subr.mxu0 0.0
          %2149 = vmatpush1.msra.mxu0 0.0
          %2150 = vmatprep.subr.mxu0 0.0
          %2151 = vmatpush1.msra.mxu0 0.0
          %2152 = vmatprep.subr.mxu0 0.0
          %2153 = vmatpush1.msra.mxu0 0.0
          %2154 = vmatprep.subr.mxu0 0.0
          %2155 = vmatpush1.msra.mxu0 0.0
          %2156 = vmatprep.subr.mxu0 0.0
          %2157 = vmatpush1.msra.mxu0 0.0
          %2158 = vmatprep.subr.mxu0 0.0
          %2159 = vmatpush1.msra.mxu0 0.0
          %2160 = vmatprep.subr.mxu0 0.0
          %2161 = vmatpush1.msra.mxu0 0.0
          %2162 = vmatprep.subr.mxu0 0.0
          %2163 = vmatpush1.msra.mxu0 0.0
          %2164 = vmatprep.subr.mxu0 0.0
          %2165 = vmatpush1.msra.mxu0 0.0
          %2166 = vmatprep.subr.mxu0 0.0
          %2167 = vmatpush1.msra.mxu0 0.0
          %2168 = vmatprep.subr.mxu0 0.0
          %2169 = vmatpush1.msra.mxu0 0.0
          %2170 = vmatprep.subr.mxu0 0.0
          %2171 = vmatpush1.msra.mxu0 0.0
          %2172 = vmatprep.subr.mxu0 0.0
          %2173 = vmatpush1.msra.mxu0 0.0
          %2174 = vmatprep.subr.mxu0 0.0
          %2175 = vmatpush1.msra.mxu0 0.0
          %2176 = vmatprep.subr.mxu0 0.0
          %2177 = vmatpush1.msra.mxu0 0.0
          %2178 = vmatprep.subr.mxu0 0.0
          %2179 = vmatpush1.msra.mxu0 0.0
          %2180 = vmatprep.subr.mxu0 0.0
          %2181 = vmatpush1.msra.mxu0 0.0
          %2182 = vmatprep.subr.mxu0 0.0
          %2183 = vmatpush1.msra.mxu0 0.0
          %2184 = vmatprep.subr.mxu0 0.0
          %2185 = vmatpush1.msra.mxu0 0.0
          %2186 = vmatprep.subr.mxu0 0.0
          %2187 = vmatpush1.msra.mxu0 0.0
          %2188 = vmatprep.mubr.f32.mxu0 0.0
          %v2189 = vand.u32 %v1747, 4294901760
          %2190 = vmatmul.mubr.f32.gmra.mrb[0].mxu0 %v2189
          %v2191 = vpop.f32.mrb[0].mxu0
          %v2192 = vadd.f32 %v2120, %v2191
          %v2193 = vpop.f32.mrb[0].mxu0
          %2194 = vdwg.mxu0
          %v2195 = vld [vmem:[%s1] sm:$0x1]
          %v2196 = vmul.f32 %v2195, %v2192
          %v2197 = vld [vmem:[%s2] sm:$0x1]
          %v2198 = vmul.f32 %v1743, %v2196
          %v2199 = vsub.f32 %v2197, %v2198
          %vm2200 = vcmask 24576
          %2201 = vst.msk [vmem:[%s240] sm:$0x1] %vm2200, %v2196
          %2202 = vst.msk [vmem:[%s240 + $0x1] sm:$0x1] %vm2200, %v2199
        $region48: #{tpu_custom_call.1} parent=39 // pred_fallthru
          _
        %s2203 = sand.u32 %s151, 1
        %s2204 = scalar_lea.sflag [#allocation5], %s2203
        %s2205 = sand.u32 %s151, 1
        %s2206 = smul.addr %s2205, 2
        %s2207 = scalar_lea.vmem [#allocation4], %s2206
        // Predicated region
        $region49: #{tpu_custom_call.1} parent=39 // pred_check
          %p2208 = pneg %p161
        $region50: #{tpu_custom_call.1} parent=39 // pred_check_branch
          %2210 = sbr.rel (%p2208) target = $region52
        $region51: #{tpu_custom_call.1} parent=39 // pred_region
          %s2212 = ssub.s32 32, 32
          %2213 = vsyncadd %s2204, %s2212
          %s2214 = smul.addr %s23, 32
          %s2215 = scalar_lea.hbm %s5, %s2214
          %s2217 = sshll.u32 %s2207, 4
          %s2218 = int_to_ptr.vmem [resolvable:$true] %s2217
          %2220 = dma.vmem_to_hbm [thread:$0]  %s2218, 32, %s2215, %s2204
        $region52: #{tpu_custom_call.1} parent=39 // pred_fallthru
          _
      $region40: #{tpu_custom_call.1} parent=5 // pred_fallthru
        _
      %p2221 = scmp.le.s32.totalorder 2, %s14
      // Predicated region
      $region53: #{tpu_custom_call.1} parent=5 // pred_check
        %p2222 = pneg %p2221
      $region54: #{tpu_custom_call.1} parent=5 // pred_check_branch
        %2224 = sbr.rel (%p2222) target = $region56
      $region55: #{tpu_custom_call.1} parent=5 // pred_region
        %s2225 = ssub.s32 %s14, 2
        // Predicated region
        $region57: #{tpu_custom_call.1} parent=55 // pred_check
          %p2226 = pneg %p167
        $region58: #{tpu_custom_call.1} parent=55 // pred_check_branch
          %2228 = sbr.rel (%p2226) target = $region60
        $region59: #{tpu_custom_call.1} parent=55 // pred_region
          %s2229 = sand.u32 %s152, 1
          %s2230 = scalar_lea.sflag [#allocation5], %s2229
          %s2231 = sand.u32 %s152, 1
          %s2232 = smul.addr %s2231, 2
          %s2233 = scalar_lea.vmem [#allocation4], %s2232
          %2234 = dma.done %s2230, 32
        $region60: #{tpu_custom_call.1} parent=55 // pred_fallthru
          _
      $region56: #{tpu_custom_call.1} parent=5 // pred_fallthru
        _
    $region6: #{tpu_custom_call.1} parent=1 // loop_footer
      %s18 = sadd.s32 1, %s14
    $region7: #{tpu_custom_call.1} parent=1 // loop_footer_branch
      %13 = sbr.rel target = $region3
    $region8: #{tpu_custom_call.1} parent=1 // loop_exit
      _
    %2235 = vsyncpa [#allocation5], 1
    %s2236 = scalar_lea.sflag [#allocation5], 1
    %2237 = vsyncpa %s2236, 1

</llo_original>
